<compile_context>
chip_gen: v5e
topology: v5e:2x2
jax: 0.10.0
libtpu: 0.0.40
codegen_flags: <defaults>
</compile_context>

<pallas_src>
import math
import functools

import jax
import jax.numpy as jnp
from jax.experimental import pallas as pl
from jax.experimental.pallas import tpu as pltpu


# ---------------------------------------------------------------------------
# Fused kernel: embedding + PE (layer step 0) followed by all TransformerBlocks
# streamed along grid axis 1.  Activations stay resident in the output block.
# ---------------------------------------------------------------------------
def tvts_bert_kernel(x_ref, bias_ref, embw_ref, embb_ref, pe_ref,
                     wqkv_ref, bqkv_ref, wo_ref, bo_ref,
                     ln1a_ref, ln1b_ref, ln2a_ref, ln2b_ref,
                     w1_ref, b1_ref, w2_ref, b2_ref,
                     o_ref, ctx_ref, *, num_heads):
    l = pl.program_id(1)
    Bb, T, W = x_ref.shape
    D = embw_ref.shape[1]
    H = num_heads
    d_k = D // H

    # --- embedding + positional encoding: only at the first layer step -----
    @pl.when(l == 0)
    def _():
        xw = x_ref[...].reshape(Bb * T, W)                     # keep f32 input
        emb = jnp.dot(xw, embw_ref[...],
                      preferred_element_type=jnp.float32) + embb_ref[...]
        o_ref[...] = emb.reshape(Bb, T, D) + pe_ref[...]        # PE broadcast

    def layer_norm(v, a, b, eps=1e-6):
        # matches the custom PyTorch LayerNorm: unbiased std, eps added to std
        mean = jnp.mean(v, axis=-1, keepdims=True)
        var = jnp.sum((v - mean) ** 2, axis=-1, keepdims=True) / (v.shape[-1] - 1)
        inv = pl.reciprocal(jnp.sqrt(var) + eps, approx=True)
        return a * (v - mean) * inv + b

    x2 = o_ref[...].reshape(Bb * T, D)                          # resident f32
    # hoisted additive key-mask bias, broadcast once per layer step
    bias_b = jnp.broadcast_to(bias_ref[...], (Bb, T, T))

    # --- multi-head self-attention sublayer (pre-norm) ---------------------
    xn = layer_norm(x2, ln1a_ref[0], ln1b_ref[0]).astype(jnp.bfloat16)
    # single lane-dense (Bb*T, D) x (D, 3D) projection; 1/sqrt(d_k) pre-folded
    qkv = jnp.dot(xn, wqkv_ref[0], preferred_element_type=jnp.float32) + bqkv_ref[0]

    # Per-head score/softmax/context (inherently per-head, small tensors).
    # The big projection matmuls are hoisted out of this loop, so the static
    # unroll only carries (Bb,T,T)/(Bb,T,d_k) temporaries per iteration.
    for h in range(H):
        q = qkv[:, h * d_k:(h + 1) * d_k].reshape(Bb, T, d_k)
        k = qkv[:, D + h * d_k:D + (h + 1) * d_k].reshape(Bb, T, d_k)
        v = qkv[:, 2 * D + h * d_k:2 * D + (h + 1) * d_k].reshape(Bb, T, d_k)
        s = jnp.einsum('bqd,bkd->bqk',
                       q.astype(jnp.bfloat16), k.astype(jnp.bfloat16),
                       preferred_element_type=jnp.float32) + bias_b
        m = jnp.max(s, axis=-1, keepdims=True)
        e = jnp.exp(s - m)
        p = e * pl.reciprocal(jnp.sum(e, axis=-1, keepdims=True), approx=True)
        ctx = jnp.einsum('bqk,bkd->bqd',
                         p.astype(jnp.bfloat16), v.astype(jnp.bfloat16),
                         preferred_element_type=jnp.float32)
        ctx_ref[:, h * d_k:(h + 1) * d_k] = ctx.reshape(Bb * T, d_k)

    # single full-width (D, D) output projection on the assembled context
    attn = jnp.dot(ctx_ref[...].astype(jnp.bfloat16), wo_ref[0],
                   preferred_element_type=jnp.float32) + bo_ref[0]
    x2 = x2 + attn                                             # dropout = identity

    # --- position-wise feed-forward sublayer (pre-norm) --------------------
    # TODO(synk): on v7x at large D/d_ff, chunk w1/w2 along d_ff (emit_pipeline
    # or a third grid axis) instead of shrinking Bb when double-buffered FFN
    # weights overflow the 64 MiB VMEM; the host heuristic shrinks Bb for now.
    xn = layer_norm(x2, ln2a_ref[0], ln2b_ref[0]).astype(jnp.bfloat16)
    hdd = jnp.dot(xn, w1_ref[0], preferred_element_type=jnp.float32) + b1_ref[0]
    g = 0.5 * hdd * (1.0 + jnp.tanh(math.sqrt(2.0 / math.pi)
                                    * (hdd + 0.044715 * hdd ** 3)))  # BERT GELU
    ffn = jnp.dot(g.astype(jnp.bfloat16), w2_ref[0],
                  preferred_element_type=jnp.float32) + b2_ref[0]
    x2 = x2 + ffn                                              # dropout = identity

    # TODO(synk): for D not a multiple of 128 (e.g. the demo D=32) this store
    # is lane-masked; a lane-dense (B, T*D) output slab would need an
    # in-kernel minor-dim reshape and LN over padded lanes would break.
    o_ref[...] = x2.reshape(Bb, T, D)


# ---------------------------------------------------------------------------
# Host-side helpers
# ---------------------------------------------------------------------------
def _tpu_config():
    """(physical VMEM bytes, #TensorCores sharing the megacore grid)."""
    vmem_bytes = 128 * 1024 * 1024
    n_cores = 1
    try:
        kind = (jax.devices()[0].device_kind or "").lower()
        if "v7" in kind:
            vmem_bytes = 64 * 1024 * 1024
            n_cores = 2
        elif "v4" in kind or "v5p" in kind or "v5 p" in kind:
            n_cores = 2
    except Exception:
        pass
    try:
        info = pltpu.get_tpu_info()
        vmem_bytes = int(getattr(info, "vmem_capacity_bytes", vmem_bytes))
    except Exception:
        pass
    return vmem_bytes, n_cores


def _rows_budget(vmem_limit_bytes, W, D, d_ff, T, layer_weight_bytes):
    """Max activation rows (Bb*T) that fit the VMEM budget alongside the
    double-buffered per-layer weight stream."""
    reserve = 2 * layer_weight_bytes + (W * D + T * D + 4 * D) * 4 + (4 << 20)
    avail = max(vmem_limit_bytes - reserve, 2 << 20)
    # resident out block + x block (f32), ctx scratch (f32), live f32
    # temporaries (qkv: 3D, ffn hidden: d_ff, xn/attn/ffn: ~3D), per-head
    # score/softmax temporaries (~3*T f32, one head live at a time).
    per_row = 4 * (D + W) + 4 * D + 4 * (3 * D + d_ff + 3 * D) + 12 * T
    return max(T, int(avail // per_row))


def _pick_batch_block(B, T, rows_max, n_cores):
    """Largest batch block that fits the row budget, preferring exactly
    n_cores (or a multiple) grid steps on the parallel axis: B//Bb == 1 on
    single-TC chips (v5e/v6e), == 2 on v7x megacore."""
    divisors = [d for d in range(1, B + 1) if B % d == 0]
    feas = [d for d in divisors if d * T <= rows_max] or [1]
    pref = [d for d in feas if (B // d) % n_cores == 0]
    return max(pref or feas)


def _stack_layer_params(layers, num_heads):
    """Stack per-layer params along a leading L axis.  Wq|Wk|Wv are fused into
    a single lane-dense (D, 3D) weight (1/sqrt(d_k) folded into the Q part);
    the output projection stays a full (D, D) weight."""
    D = layers[0]["wq"].shape[0]
    d_k = D // num_heads
    scale = 1.0 / math.sqrt(d_k)
    f32, bf16 = jnp.float32, jnp.bfloat16

    wqkv = jnp.stack([jnp.concatenate([lp["wq"] * scale, lp["wk"], lp["wv"]], axis=1)
                      for lp in layers]).astype(bf16)               # (L, D, 3D)
    bqkv = jnp.stack([jnp.concatenate([lp["bq"] * scale, lp["bk"], lp["bv"]], axis=1)
                      for lp in layers]).astype(f32)                # (L, 1, 3D)
    return dict(
        wqkv=wqkv, bqkv=bqkv,
        wo=jnp.stack([lp["wo"] for lp in layers]).astype(bf16),
        bo=jnp.stack([lp["bo"] for lp in layers]).astype(f32),
        ln1a=jnp.stack([lp["ln1a"] for lp in layers]).astype(f32),
        ln1b=jnp.stack([lp["ln1b"] for lp in layers]).astype(f32),
        ln2a=jnp.stack([lp["ln2a"] for lp in layers]).astype(f32),
        ln2b=jnp.stack([lp["ln2b"] for lp in layers]).astype(f32),
        w1=jnp.stack([lp["w1"] for lp in layers]).astype(bf16),
        b1=jnp.stack([lp["b1"] for lp in layers]).astype(f32),
        w2=jnp.stack([lp["w2"] for lp in layers]).astype(bf16),
        b2=jnp.stack([lp["b2"] for lp in layers]).astype(f32),
    )


def tvts_bert_forward(x, mask, params, word_len, num_heads):
    B = x.shape[0]
    x = x.reshape(B, -1, word_len).astype(jnp.float32)      # view(B, T, word_len)
    T, W = x.shape[1], word_len
    D = params["emb_w"].shape[1]
    L = len(params["layers"])
    d_ff = params["layers"][0]["w1"].shape[1]
    H = num_heads
    assert D % H == 0, "hidden must be divisible by attn_heads"
    assert T % 8 == 0, "sequence length should be a multiple of 8 (sublane tile)"

    # additive key-position mask bias (0 keep / -1e9 drop), shape (B, 1, T)
    bias = jnp.where(mask > 0, 0.0, -1e9).astype(jnp.float32)[:, None, :]

    emb_w = params["emb_w"].astype(jnp.float32)              # keep embedding in f32
    emb_b = params["emb_b"].astype(jnp.float32)
    pe_t = params["pe"][:T].astype(jnp.float32)
    sp = _stack_layer_params(params["layers"], H)

    # --- generation-aware VMEM budgeting & batch-block choice ---------------
    vmem_phys, n_cores = _tpu_config()
    vmem_limit = max(vmem_phys * 3 // 4, 32 * 1024 * 1024)   # ~96 MiB v5e/v6e, ~48 MiB v7x
    layer_w_bytes = (4 * D * D + 2 * D * d_ff) * 2 + (9 * D + d_ff) * 4
    rows_max = _rows_budget(vmem_limit, W, D, d_ff, T, layer_w_bytes)
    Bb = _pick_batch_block(B, T, rows_max, n_cores)
    grid = (B // Bb, L)

    def row_map(i, l):          # constant along the layer axis -> resident block
        return (i, 0, 0)

    def layer_map(i, l):        # streams along the layer axis
        return (l, 0, 0)

    def const2(i, l):
        return (0, 0)

    in_specs = [
        pl.BlockSpec((Bb, T, W), row_map),              # x
        pl.BlockSpec((Bb, 1, T), row_map),              # additive mask bias
        pl.BlockSpec((W, D), const2),                   # emb_w (f32)
        pl.BlockSpec((1, D), const2),                   # emb_b
        pl.BlockSpec((T, D), const2),                   # pe
        pl.BlockSpec((1, D, 3 * D), layer_map),         # fused Wqkv (Q pre-scaled)
        pl.BlockSpec((1, 1, 3 * D), layer_map),         # fused bqkv (Q pre-scaled)
        pl.BlockSpec((1, D, D), layer_map),             # wo
        pl.BlockSpec((1, 1, D), layer_map),             # bo
        pl.BlockSpec((1, 1, D), layer_map),             # ln1a
        pl.BlockSpec((1, 1, D), layer_map),             # ln1b
        pl.BlockSpec((1, 1, D), layer_map),             # ln2a
        pl.BlockSpec((1, 1, D), layer_map),             # ln2b
        pl.BlockSpec((1, D, d_ff), layer_map),          # w1
        pl.BlockSpec((1, 1, d_ff), layer_map),          # b1
        pl.BlockSpec((1, d_ff, D), layer_map),          # w2
        pl.BlockSpec((1, 1, D), layer_map),             # b2
    ]
    out_specs = pl.BlockSpec((Bb, T, D), row_map)

    # advisory cost estimate for the XLA scheduler
    flops = int(2 * B * T * W * D
                + L * B * (8 * T * D * D + 4 * T * T * D + 4 * T * D * d_ff))
    transcendentals = int(L * B * T * (H * T + d_ff))
    bytes_accessed = int((W * D + T * D) * 4
                         + L * layer_w_bytes
                         + B * T * (W + 1) * 4 + B * T * D * 4)

    kernel = functools.partial(tvts_bert_kernel, num_heads=H)
    return pl.pallas_call(
        kernel,
        out_shape=jax.ShapeDtypeStruct((B, T, D), jnp.float32),
        grid=grid,
        in_specs=in_specs,
        out_specs=out_specs,
        scratch_shapes=[pltpu.VMEM((Bb * T, D), jnp.float32)],   # per-head ctx assembly
        compiler_params=pltpu.CompilerParams(
            dimension_semantics=("parallel", "arbitrary"),
            vmem_limit_bytes=int(vmem_limit)),
        cost_estimate=pl.CostEstimate(
            flops=flops, transcendentals=transcendentals,
            bytes_accessed=bytes_accessed),
    )(x, bias, emb_w, emb_b, pe_t,
      sp["wqkv"], sp["bqkv"], sp["wo"], sp["bo"],
      sp["ln1a"], sp["ln1b"], sp["ln2a"], sp["ln2b"],
      sp["w1"], sp["b1"], sp["w2"], sp["b2"])


# ---------------------------------------------------------------------------
# Pure-JAX reference (mirrors the PyTorch module, f32) for validation
# ---------------------------------------------------------------------------
def tvts_bert_reference(x, mask, params, word_len, num_heads):
    B = x.shape[0]
    x = x.reshape(B, -1, word_len).astype(jnp.float32)
    T = x.shape[1]
    D = params["emb_w"].shape[1]
    H = num_heads
    d_k = D // H
    h = x @ params["emb_w"] + params["emb_b"]
    h = h + params["pe"][:T][None]
    keep = (mask > 0)                                    # (B, T) key mask

    def layer_norm(v, a, b, eps=1e-6):
        mean = v.mean(-1, keepdims=True)
        var = ((v - mean) ** 2).sum(-1, keepdims=True) / (v.shape[-1] - 1)
        return a * (v - mean) / (jnp.sqrt(var) + eps) + b

    for lp in params["layers"]:
        xn = layer_norm(h, lp["ln1a"], lp["ln1b"])
        q = (xn @ lp["wq"] + lp["bq"]).reshape(B, T, H, d_k).transpose(0, 2, 1, 3)
        k = (xn @ lp["wk"] + lp["bk"]).reshape(B, T, H, d_k).transpose(0, 2, 1, 3)
        v = (xn @ lp["wv"] + lp["bv"]).reshape(B, T, H, d_k).transpose(0, 2, 1, 3)
        s = (q @ k.transpose(0, 1, 3, 2)) / math.sqrt(d_k)
        s = jnp.where(keep[:, None, None, :], s, -1e9)
        p = jax.nn.softmax(s, axis=-1)
        ctx = (p @ v).transpose(0, 2, 1, 3).reshape(B, T, D)
        h = h + ctx @ lp["wo"] + lp["bo"]
        xn = layer_norm(h, lp["ln2a"], lp["ln2b"])
        hid = xn @ lp["w1"] + lp["b1"]
        g = 0.5 * hid * (1.0 + jnp.tanh(math.sqrt(2.0 / math.pi)
                                        * (hid + 0.044715 * hid ** 3)))
        h = h + g @ lp["w2"] + lp["b2"]
    return h


# ---------------------------------------------------------------------------
# Deterministic parameter initialization (shapes follow the PyTorch __init__)
# ---------------------------------------------------------------------------
def init_params(key, word_len, hidden, n_layers, pe_window):
    d_ff = 4 * hidden
    keys = jax.random.split(key, 1 + n_layers)

    def dense(k, fan_in, fan_out):
        k1, k2 = jax.random.split(k)
        w = jax.random.normal(k1, (fan_in, fan_out), jnp.float32) * 0.02
        b = jax.random.normal(k2, (1, fan_out), jnp.float32) * 0.02
        return w, b

    emb_w, emb_b = dense(keys[0], word_len, hidden)

    # positional-encoding buffer, same formula as the PyTorch module
    position = jnp.arange(pe_window, dtype=jnp.float32)[:, None]
    div_term = jnp.exp(jnp.arange(0, hidden, 2, dtype=jnp.float32)
                       * -(math.log(10000.0) / hidden))
    pe = jnp.zeros((pe_window, hidden), jnp.float32)
    pe = pe.at[:, 0::2].set(jnp.sin(position * div_term))
    pe = pe.at[:, 1::2].set(jnp.cos(position * div_term))

    layers = []
    for i in range(n_layers):
        lk = jax.random.split(keys[1 + i], 6)
        wq, bq = dense(lk[0], hidden, hidden)
        wk, bk = dense(lk[1], hidden, hidden)
        wv, bv = dense(lk[2], hidden, hidden)
        wo, bo = dense(lk[3], hidden, hidden)
        w1, b1 = dense(lk[4], hidden, d_ff)
        w2, b2 = dense(lk[5], d_ff, hidden)
        layers.append(dict(
            wq=wq, bq=bq, wk=wk, bk=bk, wv=wv, bv=bv, wo=wo, bo=bo,
            ln1a=jnp.ones((1, hidden), jnp.float32),
            ln1b=jnp.zeros((1, hidden), jnp.float32),
            ln2a=jnp.ones((1, hidden), jnp.float32),
            ln2b=jnp.zeros((1, hidden), jnp.float32),
            w1=w1, b1=b1, w2=w2, b2=b2))
    return dict(emb_w=emb_w, emb_b=emb_b, pe=pe, layers=layers)


if __name__ == "__main__":
    # small, forward-consistent shapes
    word_len, hidden, n_layers, attn_heads, pe_window = 16, 32, 2, 4, 64
    B, T = 2, 8

    key = jax.random.PRNGKey(0)
    kx, km, kp = jax.random.split(key, 3)
    x = jax.random.normal(kx, (B, T * word_len), jnp.float32)   # viewed to (B, T, word_len)
    mask = (jax.random.uniform(km, (B, T)) > 0.3).astype(jnp.int32)
    params = init_params(kp, word_len, hidden, n_layers, pe_window)

    out = tvts_bert_forward(x, mask, params, word_len, attn_heads)
    out = jax.block_until_ready(out)

    assert out.shape == (B, T, hidden)
    assert bool(jnp.all(jnp.isfinite(out)))

    ref = tvts_bert_reference(x, mask, params, word_len, attn_heads)
    err = float(jnp.max(jnp.abs(out - ref)))
    assert err < 5e-2, f"max abs error vs reference: {err}"
    print("KERNEL_OK")
</pallas_src>

<mosaic_0001>
module attributes {stable_mosaic.version = 11 : i64} {
  func.func @tvts_bert_kernel(%arg0: i32, %arg1: i32, %arg2: memref<2x8x16xf32, #tpu.memory_space<vmem>>, %arg3: memref<2x1x8xf32, #tpu.memory_space<vmem>>, %arg4: memref<16x32xf32, #tpu.memory_space<vmem>>, %arg5: memref<1x32xf32, #tpu.memory_space<vmem>>, %arg6: memref<8x32xf32, #tpu.memory_space<vmem>>, %arg7: memref<1x32x96xbf16, #tpu.memory_space<vmem>>, %arg8: memref<1x1x96xf32, #tpu.memory_space<vmem>>, %arg9: memref<1x32x32xbf16, #tpu.memory_space<vmem>>, %arg10: memref<1x1x32xf32, #tpu.memory_space<vmem>>, %arg11: memref<1x1x32xf32, #tpu.memory_space<vmem>>, %arg12: memref<1x1x32xf32, #tpu.memory_space<vmem>>, %arg13: memref<1x1x32xf32, #tpu.memory_space<vmem>>, %arg14: memref<1x1x32xf32, #tpu.memory_space<vmem>>, %arg15: memref<1x32x128xbf16, #tpu.memory_space<vmem>>, %arg16: memref<1x1x128xf32, #tpu.memory_space<vmem>>, %arg17: memref<1x128x32xbf16, #tpu.memory_space<vmem>>, %arg18: memref<1x1x32xf32, #tpu.memory_space<vmem>>, %arg19: memref<2x8x32xf32, #tpu.memory_space<vmem>>, %arg20: memref<16x32xf32, #tpu.memory_space<vmem>>) attributes {dimension_semantics = [#tpu.dimension_semantics<parallel>, #tpu.dimension_semantics<arbitrary>], iteration_bounds = array<i64: 1, 2>, scalar_prefetch = 0 : i64, scratch_operands = 1 : i64, tpu.core_type = #tpu.core_type<tc>, window_params = [{transform_indices = @transform_0, window_bounds = array<i64: 2, 8, 16>}, {transform_indices = @transform_1, window_bounds = array<i64: 2, 1, 8>}, {pipeline_mode = #tpu.pipeline_mode<synchronous>, transform_indices = @transform_2, window_bounds = array<i64: 16, 32>}, {pipeline_mode = #tpu.pipeline_mode<synchronous>, transform_indices = @transform_3, window_bounds = array<i64: 1, 32>}, {pipeline_mode = #tpu.pipeline_mode<synchronous>, transform_indices = @transform_4, window_bounds = array<i64: 8, 32>}, {transform_indices = @transform_5, window_bounds = array<i64: 1, 32, 96>}, {transform_indices = @transform_6, window_bounds = array<i64: 1, 1, 96>}, {transform_indices = @transform_7, window_bounds = array<i64: 1, 32, 32>}, {transform_indices = @transform_8, window_bounds = array<i64: 1, 1, 32>}, {transform_indices = @transform_9, window_bounds = array<i64: 1, 1, 32>}, {transform_indices = @transform_10, window_bounds = array<i64: 1, 1, 32>}, {transform_indices = @transform_11, window_bounds = array<i64: 1, 1, 32>}, {transform_indices = @transform_12, window_bounds = array<i64: 1, 1, 32>}, {transform_indices = @transform_13, window_bounds = array<i64: 1, 32, 128>}, {transform_indices = @transform_14, window_bounds = array<i64: 1, 1, 128>}, {transform_indices = @transform_15, window_bounds = array<i64: 1, 128, 32>}, {transform_indices = @transform_16, window_bounds = array<i64: 1, 1, 32>}, {transform_indices = @transform_17, window_bounds = array<i64: 2, 8, 32>}]} {
    %c0_i32 = arith.constant 0 : i32
    %0 = arith.cmpi eq, %arg1, %c0_i32 : i32
    %1 = arith.extui %0 : i1 to i32
    %c0_i32_0 = arith.constant 0 : i32
    %2 = arith.cmpi ne, %1, %c0_i32_0 : i32
    scf.if %2 {
      %c0_85 = arith.constant 0 : index
      %c0_86 = arith.constant 0 : index
      %c0_87 = arith.constant 0 : index
      %212 = vector.load %arg2[%c0_85, %c0_86, %c0_87] : memref<2x8x16xf32, #tpu.memory_space<vmem>>, vector<2x8x16xf32>
      %213 = vector.shape_cast %212 : vector<2x8x16xf32> to vector<16x16xf32>
      %c0_88 = arith.constant 0 : index
      %c0_89 = arith.constant 0 : index
      %214 = vector.load %arg4[%c0_88, %c0_89] : memref<16x32xf32, #tpu.memory_space<vmem>>, vector<16x32xf32>
      %cst_90 = arith.constant dense<0.000000e+00> : vector<16x32xf32>
      %215 = tpu.matmul %213, %214, %cst_90 {dimension_numbers = #tpu.dot_dimension_numbers<[1], [0], [0], [1], [0, 0, 1, 1], [], []>} : vector<16x16xf32>, vector<16x32xf32>, vector<16x32xf32> -> vector<16x32xf32>
      %c0_91 = arith.constant 0 : index
      %c0_92 = arith.constant 0 : index
      %216 = vector.load %arg5[%c0_91, %c0_92] : memref<1x32xf32, #tpu.memory_space<vmem>>, vector<1x32xf32>
      %217 = vector.broadcast %216 : vector<1x32xf32> to vector<16x32xf32>
      %218 = arith.addf %215, %217 : vector<16x32xf32>
      %219 = vector.shape_cast %218 : vector<16x32xf32> to vector<2x8x32xf32>
      %c0_93 = arith.constant 0 : index
      %c0_94 = arith.constant 0 : index
      %220 = vector.load %arg6[%c0_93, %c0_94] : memref<8x32xf32, #tpu.memory_space<vmem>>, vector<8x32xf32>
      %221 = vector.shape_cast %220 : vector<8x32xf32> to vector<1x8x32xf32>
      %222 = vector.broadcast %221 : vector<1x8x32xf32> to vector<2x8x32xf32>
      %223 = arith.addf %219, %222 : vector<2x8x32xf32>
      %c0_95 = arith.constant 0 : index
      %c0_96 = arith.constant 0 : index
      %c0_97 = arith.constant 0 : index
      %224 = vector.load %arg19[%c0_95, %c0_96, %c0_97] : memref<2x8x32xf32, #tpu.memory_space<vmem>>, vector<2x8x32xf32>
      tpu.vector_store %arg19[%c0_95, %c0_96, %c0_97], %223 {strides = array<i32>} : memref<2x8x32xf32, #tpu.memory_space<vmem>>, vector<2x8x32xf32>,
    } else {
    }
    %c0 = arith.constant 0 : index
    %c0_1 = arith.constant 0 : index
    %c0_2 = arith.constant 0 : index
    %3 = vector.load %arg19[%c0, %c0_1, %c0_2] : memref<2x8x32xf32, #tpu.memory_space<vmem>>, vector<2x8x32xf32>
    %4 = vector.shape_cast %3 : vector<2x8x32xf32> to vector<16x32xf32>
    %c0_3 = arith.constant 0 : index
    %c0_4 = arith.constant 0 : index
    %c0_5 = arith.constant 0 : index
    %5 = vector.load %arg3[%c0_3, %c0_4, %c0_5] : memref<2x1x8xf32, #tpu.memory_space<vmem>>, vector<2x1x8xf32>
    %6 = vector.shape_cast %5 : vector<2x1x8xf32> to vector<2x1x8xf32>
    %7 = vector.broadcast %6 : vector<2x1x8xf32> to vector<2x8x8xf32>
    %c0_6 = arith.constant 0 : index
    %c0_7 = arith.constant 0 : index
    %c0_8 = arith.constant 0 : index
    %8 = vector.load %arg11[%c0_6, %c0_7, %c0_8] : memref<1x1x32xf32, #tpu.memory_space<vmem>>, vector<1x1x32xf32>
    %9 = vector.shape_cast %8 : vector<1x1x32xf32> to vector<1x32xf32>
    %c0_9 = arith.constant 0 : index
    %c0_10 = arith.constant 0 : index
    %c0_11 = arith.constant 0 : index
    %10 = vector.load %arg12[%c0_9, %c0_10, %c0_11] : memref<1x1x32xf32, #tpu.memory_space<vmem>>, vector<1x1x32xf32>
    %11 = vector.shape_cast %10 : vector<1x1x32xf32> to vector<1x32xf32>
    %cst = arith.constant dense<0.000000e+00> : vector<16xf32>
    %12 = vector.multi_reduction <add>, %4, %cst [1] : vector<16x32xf32> to vector<16xf32>
    %13 = vector.shape_cast %12 : vector<16xf32> to vector<16x1xf32>
    %cst_12 = arith.constant 3.200000e+01 : f32
    %14 = vector.broadcast %cst_12 : f32 to vector<16x1xf32>
    %15 = arith.divf %13, %14 : vector<16x1xf32>
    %16 = vector.broadcast %15 : vector<16x1xf32> to vector<16x32xf32>
    %17 = arith.subf %4, %16 : vector<16x32xf32>
    %18 = arith.mulf %17, %17 : vector<16x32xf32>
    %cst_13 = arith.constant dense<0.000000e+00> : vector<16xf32>
    %19 = vector.multi_reduction <add>, %18, %cst_13 [1] : vector<16x32xf32> to vector<16xf32>
    %20 = vector.shape_cast %19 : vector<16xf32> to vector<16x1xf32>
    %cst_14 = arith.constant 3.100000e+01 : f32
    %21 = vector.broadcast %cst_14 : f32 to vector<16x1xf32>
    %22 = arith.divf %20, %21 : vector<16x1xf32>
    %23 = math.sqrt %22 : vector<16x1xf32>
    %cst_15 = arith.constant 9.99999997E-7 : f32
    %24 = vector.broadcast %cst_15 : f32 to vector<16x1xf32>
    %25 = arith.addf %23, %24 : vector<16x1xf32>
    %26 = tpu.reciprocal %25 {approx = true} : vector<16x1xf32> -> vector<16x1xf32>
    %27 = vector.broadcast %15 : vector<16x1xf32> to vector<16x32xf32>
    %28 = arith.subf %4, %27 : vector<16x32xf32>
    %29 = vector.broadcast %9 : vector<1x32xf32> to vector<16x32xf32>
    %30 = arith.mulf %29, %28 : vector<16x32xf32>
    %31 = vector.broadcast %26 : vector<16x1xf32> to vector<16x32xf32>
    %32 = arith.mulf %30, %31 : vector<16x32xf32>
    %33 = vector.broadcast %11 : vector<1x32xf32> to vector<16x32xf32>
    %34 = arith.addf %32, %33 : vector<16x32xf32>
    %35 = arith.truncf %34 : vector<16x32xf32> to vector<16x32xbf16>
    %c0_16 = arith.constant 0 : index
    %c0_17 = arith.constant 0 : index
    %c0_18 = arith.constant 0 : index
    %36 = vector.load %arg7[%c0_16, %c0_17, %c0_18] : memref<1x32x96xbf16, #tpu.memory_space<vmem>>, vector<1x32x96xbf16>
    %37 = vector.shape_cast %36 : vector<1x32x96xbf16> to vector<32x96xbf16>
    %cst_19 = arith.constant dense<0.000000e+00> : vector<16x96xf32>
    %38 = tpu.matmul %35, %37, %cst_19 {dimension_numbers = #tpu.dot_dimension_numbers<[1], [0], [0], [1], [0, 0, 1, 1], [], []>} : vector<16x32xbf16>, vector<32x96xbf16>, vector<16x96xf32> -> vector<16x96xf32>
    %c0_20 = arith.constant 0 : index
    %c0_21 = arith.constant 0 : index
    %c0_22 = arith.constant 0 : index
    %39 = vector.load %arg8[%c0_20, %c0_21, %c0_22] : memref<1x1x96xf32, #tpu.memory_space<vmem>>, vector<1x1x96xf32>
    %40 = vector.shape_cast %39 : vector<1x1x96xf32> to vector<1x96xf32>
    %41 = vector.broadcast %40 : vector<1x96xf32> to vector<16x96xf32>
    %42 = arith.addf %38, %41 : vector<16x96xf32>
    %43 = vector.extract_strided_slice %42 {offsets = [0, 0], sizes = [16, 8], strides = [1, 1]} : vector<16x96xf32> to vector<16x8xf32>
    %44 = vector.shape_cast %43 : vector<16x8xf32> to vector<2x8x8xf32>
    %45 = vector.extract_strided_slice %42 {offsets = [0, 32], sizes = [16, 8], strides = [1, 1]} : vector<16x96xf32> to vector<16x8xf32>
    %46 = vector.shape_cast %45 : vector<16x8xf32> to vector<2x8x8xf32>
    %47 = vector.extract_strided_slice %42 {offsets = [0, 64], sizes = [16, 8], strides = [1, 1]} : vector<16x96xf32> to vector<16x8xf32>
    %48 = vector.shape_cast %47 : vector<16x8xf32> to vector<2x8x8xf32>
    %49 = arith.truncf %44 : vector<2x8x8xf32> to vector<2x8x8xbf16>
    %50 = arith.truncf %46 : vector<2x8x8xf32> to vector<2x8x8xbf16>
    "tpu.trace_start"() <{level = 10 : i32, message = "bqd,bkd->bqk"}> : () -> ()
    %cst_23 = arith.constant dense<0.000000e+00> : vector<2x8x8xf32>
    %51 = tpu.matmul %49, %50, %cst_23 {dimension_numbers = #tpu.dot_dimension_numbers<[2], [2], [1], [1], [0, 0, 0, 1, 1, 1], [0], [0]>} : vector<2x8x8xbf16>, vector<2x8x8xbf16>, vector<2x8x8xf32> -> vector<2x8x8xf32>
    "tpu.trace_stop"() : () -> ()
    %52 = arith.addf %51, %7 : vector<2x8x8xf32>
    %cst_24 = arith.constant dense<0xFF800000> : vector<2x8xf32>
    %53 = vector.multi_reduction <maximumf>, %52, %cst_24 [2] : vector<2x8x8xf32> to vector<2x8xf32>
    %54 = vector.shape_cast %53 : vector<2x8xf32> to vector<2x8x1xf32>
    %55 = vector.broadcast %54 : vector<2x8x1xf32> to vector<2x8x8xf32>
    %56 = arith.subf %52, %55 : vector<2x8x8xf32>
    %57 = math.exp %56 : vector<2x8x8xf32>
    %cst_25 = arith.constant dense<0.000000e+00> : vector<2x8xf32>
    %58 = vector.multi_reduction <add>, %57, %cst_25 [2] : vector<2x8x8xf32> to vector<2x8xf32>
    %59 = vector.shape_cast %58 : vector<2x8xf32> to vector<2x8x1xf32>
    %60 = tpu.reciprocal %59 {approx = true} : vector<2x8x1xf32> -> vector<2x8x1xf32>
    %61 = vector.broadcast %60 : vector<2x8x1xf32> to vector<2x8x8xf32>
    %62 = arith.mulf %57, %61 : vector<2x8x8xf32>
    %63 = arith.truncf %62 : vector<2x8x8xf32> to vector<2x8x8xbf16>
    %64 = arith.truncf %48 : vector<2x8x8xf32> to vector<2x8x8xbf16>
    "tpu.trace_start"() <{level = 10 : i32, message = "bqk,bkd->bqd"}> : () -> ()
    %cst_26 = arith.constant dense<0.000000e+00> : vector<2x8x8xf32>
    %65 = tpu.matmul %63, %64, %cst_26 {dimension_numbers = #tpu.dot_dimension_numbers<[2], [1], [1], [2], [0, 0, 0, 1, 1, 2], [0], [0]>} : vector<2x8x8xbf16>, vector<2x8x8xbf16>, vector<2x8x8xf32> -> vector<2x8x8xf32>
    "tpu.trace_stop"() : () -> ()
    %66 = vector.shape_cast %65 : vector<2x8x8xf32> to vector<16x8xf32>
    %c0_27 = arith.constant 0 : index
    %c0_28 = arith.constant 0 : index
    %67 = vector.load %arg20[%c0_27, %c0_28] : memref<16x32xf32, #tpu.memory_space<vmem>>, vector<16x8xf32>
    tpu.vector_store %arg20[%c0_27, %c0_28], %66 {strides = array<i32>} : memref<16x32xf32, #tpu.memory_space<vmem>>, vector<16x8xf32>,
    %68 = vector.extract_strided_slice %42 {offsets = [0, 8], sizes = [16, 8], strides = [1, 1]} : vector<16x96xf32> to vector<16x8xf32>
    %69 = vector.shape_cast %68 : vector<16x8xf32> to vector<2x8x8xf32>
    %70 = vector.extract_strided_slice %42 {offsets = [0, 40], sizes = [16, 8], strides = [1, 1]} : vector<16x96xf32> to vector<16x8xf32>
    %71 = vector.shape_cast %70 : vector<16x8xf32> to vector<2x8x8xf32>
    %72 = vector.extract_strided_slice %42 {offsets = [0, 72], sizes = [16, 8], strides = [1, 1]} : vector<16x96xf32> to vector<16x8xf32>
    %73 = vector.shape_cast %72 : vector<16x8xf32> to vector<2x8x8xf32>
    %74 = arith.truncf %69 : vector<2x8x8xf32> to vector<2x8x8xbf16>
    %75 = arith.truncf %71 : vector<2x8x8xf32> to vector<2x8x8xbf16>
    "tpu.trace_start"() <{level = 10 : i32, message = "bqd,bkd->bqk"}> : () -> ()
    %cst_29 = arith.constant dense<0.000000e+00> : vector<2x8x8xf32>
    %76 = tpu.matmul %74, %75, %cst_29 {dimension_numbers = #tpu.dot_dimension_numbers<[2], [2], [1], [1], [0, 0, 0, 1, 1, 1], [0], [0]>} : vector<2x8x8xbf16>, vector<2x8x8xbf16>, vector<2x8x8xf32> -> vector<2x8x8xf32>
    "tpu.trace_stop"() : () -> ()
    %77 = arith.addf %76, %7 : vector<2x8x8xf32>
    %cst_30 = arith.constant dense<0xFF800000> : vector<2x8xf32>
    %78 = vector.multi_reduction <maximumf>, %77, %cst_30 [2] : vector<2x8x8xf32> to vector<2x8xf32>
    %79 = vector.shape_cast %78 : vector<2x8xf32> to vector<2x8x1xf32>
    %80 = vector.broadcast %79 : vector<2x8x1xf32> to vector<2x8x8xf32>
    %81 = arith.subf %77, %80 : vector<2x8x8xf32>
    %82 = math.exp %81 : vector<2x8x8xf32>
    %cst_31 = arith.constant dense<0.000000e+00> : vector<2x8xf32>
    %83 = vector.multi_reduction <add>, %82, %cst_31 [2] : vector<2x8x8xf32> to vector<2x8xf32>
    %84 = vector.shape_cast %83 : vector<2x8xf32> to vector<2x8x1xf32>
    %85 = tpu.reciprocal %84 {approx = true} : vector<2x8x1xf32> -> vector<2x8x1xf32>
    %86 = vector.broadcast %85 : vector<2x8x1xf32> to vector<2x8x8xf32>
    %87 = arith.mulf %82, %86 : vector<2x8x8xf32>
    %88 = arith.truncf %87 : vector<2x8x8xf32> to vector<2x8x8xbf16>
    %89 = arith.truncf %73 : vector<2x8x8xf32> to vector<2x8x8xbf16>
    "tpu.trace_start"() <{level = 10 : i32, message = "bqk,bkd->bqd"}> : () -> ()
    %cst_32 = arith.constant dense<0.000000e+00> : vector<2x8x8xf32>
    %90 = tpu.matmul %88, %89, %cst_32 {dimension_numbers = #tpu.dot_dimension_numbers<[2], [1], [1], [2], [0, 0, 0, 1, 1, 2], [0], [0]>} : vector<2x8x8xbf16>, vector<2x8x8xbf16>, vector<2x8x8xf32> -> vector<2x8x8xf32>
    "tpu.trace_stop"() : () -> ()
    %91 = vector.shape_cast %90 : vector<2x8x8xf32> to vector<16x8xf32>
    %c0_33 = arith.constant 0 : index
    %c8 = arith.constant 8 : index
    %92 = vector.load %arg20[%c0_33, %c8] : memref<16x32xf32, #tpu.memory_space<vmem>>, vector<16x8xf32>
    tpu.vector_store %arg20[%c0_33, %c8], %91 {strides = array<i32>} : memref<16x32xf32, #tpu.memory_space<vmem>>, vector<16x8xf32>,
    %93 = vector.extract_strided_slice %42 {offsets = [0, 16], sizes = [16, 8], strides = [1, 1]} : vector<16x96xf32> to vector<16x8xf32>
    %94 = vector.shape_cast %93 : vector<16x8xf32> to vector<2x8x8xf32>
    %95 = vector.extract_strided_slice %42 {offsets = [0, 48], sizes = [16, 8], strides = [1, 1]} : vector<16x96xf32> to vector<16x8xf32>
    %96 = vector.shape_cast %95 : vector<16x8xf32> to vector<2x8x8xf32>
    %97 = vector.extract_strided_slice %42 {offsets = [0, 80], sizes = [16, 8], strides = [1, 1]} : vector<16x96xf32> to vector<16x8xf32>
    %98 = vector.shape_cast %97 : vector<16x8xf32> to vector<2x8x8xf32>
    %99 = arith.truncf %94 : vector<2x8x8xf32> to vector<2x8x8xbf16>
    %100 = arith.truncf %96 : vector<2x8x8xf32> to vector<2x8x8xbf16>
    "tpu.trace_start"() <{level = 10 : i32, message = "bqd,bkd->bqk"}> : () -> ()
    %cst_34 = arith.constant dense<0.000000e+00> : vector<2x8x8xf32>
    %101 = tpu.matmul %99, %100, %cst_34 {dimension_numbers = #tpu.dot_dimension_numbers<[2], [2], [1], [1], [0, 0, 0, 1, 1, 1], [0], [0]>} : vector<2x8x8xbf16>, vector<2x8x8xbf16>, vector<2x8x8xf32> -> vector<2x8x8xf32>
    "tpu.trace_stop"() : () -> ()
    %102 = arith.addf %101, %7 : vector<2x8x8xf32>
    %cst_35 = arith.constant dense<0xFF800000> : vector<2x8xf32>
    %103 = vector.multi_reduction <maximumf>, %102, %cst_35 [2] : vector<2x8x8xf32> to vector<2x8xf32>
    %104 = vector.shape_cast %103 : vector<2x8xf32> to vector<2x8x1xf32>
    %105 = vector.broadcast %104 : vector<2x8x1xf32> to vector<2x8x8xf32>
    %106 = arith.subf %102, %105 : vector<2x8x8xf32>
    %107 = math.exp %106 : vector<2x8x8xf32>
    %cst_36 = arith.constant dense<0.000000e+00> : vector<2x8xf32>
    %108 = vector.multi_reduction <add>, %107, %cst_36 [2] : vector<2x8x8xf32> to vector<2x8xf32>
    %109 = vector.shape_cast %108 : vector<2x8xf32> to vector<2x8x1xf32>
    %110 = tpu.reciprocal %109 {approx = true} : vector<2x8x1xf32> -> vector<2x8x1xf32>
    %111 = vector.broadcast %110 : vector<2x8x1xf32> to vector<2x8x8xf32>
    %112 = arith.mulf %107, %111 : vector<2x8x8xf32>
    %113 = arith.truncf %112 : vector<2x8x8xf32> to vector<2x8x8xbf16>
    %114 = arith.truncf %98 : vector<2x8x8xf32> to vector<2x8x8xbf16>
    "tpu.trace_start"() <{level = 10 : i32, message = "bqk,bkd->bqd"}> : () -> ()
    %cst_37 = arith.constant dense<0.000000e+00> : vector<2x8x8xf32>
    %115 = tpu.matmul %113, %114, %cst_37 {dimension_numbers = #tpu.dot_dimension_numbers<[2], [1], [1], [2], [0, 0, 0, 1, 1, 2], [0], [0]>} : vector<2x8x8xbf16>, vector<2x8x8xbf16>, vector<2x8x8xf32> -> vector<2x8x8xf32>
    "tpu.trace_stop"() : () -> ()
    %116 = vector.shape_cast %115 : vector<2x8x8xf32> to vector<16x8xf32>
    %c0_38 = arith.constant 0 : index
    %c16 = arith.constant 16 : index
    %117 = vector.load %arg20[%c0_38, %c16] : memref<16x32xf32, #tpu.memory_space<vmem>>, vector<16x8xf32>
    tpu.vector_store %arg20[%c0_38, %c16], %116 {strides = array<i32>} : memref<16x32xf32, #tpu.memory_space<vmem>>, vector<16x8xf32>,
    %118 = vector.extract_strided_slice %42 {offsets = [0, 24], sizes = [16, 8], strides = [1, 1]} : vector<16x96xf32> to vector<16x8xf32>
    %119 = vector.shape_cast %118 : vector<16x8xf32> to vector<2x8x8xf32>
    %120 = vector.extract_strided_slice %42 {offsets = [0, 56], sizes = [16, 8], strides = [1, 1]} : vector<16x96xf32> to vector<16x8xf32>
    %121 = vector.shape_cast %120 : vector<16x8xf32> to vector<2x8x8xf32>
    %122 = vector.extract_strided_slice %42 {offsets = [0, 88], sizes = [16, 8], strides = [1, 1]} : vector<16x96xf32> to vector<16x8xf32>
    %123 = vector.shape_cast %122 : vector<16x8xf32> to vector<2x8x8xf32>
    %124 = arith.truncf %119 : vector<2x8x8xf32> to vector<2x8x8xbf16>
    %125 = arith.truncf %121 : vector<2x8x8xf32> to vector<2x8x8xbf16>
    "tpu.trace_start"() <{level = 10 : i32, message = "bqd,bkd->bqk"}> : () -> ()
    %cst_39 = arith.constant dense<0.000000e+00> : vector<2x8x8xf32>
    %126 = tpu.matmul %124, %125, %cst_39 {dimension_numbers = #tpu.dot_dimension_numbers<[2], [2], [1], [1], [0, 0, 0, 1, 1, 1], [0], [0]>} : vector<2x8x8xbf16>, vector<2x8x8xbf16>, vector<2x8x8xf32> -> vector<2x8x8xf32>
    "tpu.trace_stop"() : () -> ()
    %127 = arith.addf %126, %7 : vector<2x8x8xf32>
    %cst_40 = arith.constant dense<0xFF800000> : vector<2x8xf32>
    %128 = vector.multi_reduction <maximumf>, %127, %cst_40 [2] : vector<2x8x8xf32> to vector<2x8xf32>
    %129 = vector.shape_cast %128 : vector<2x8xf32> to vector<2x8x1xf32>
    %130 = vector.broadcast %129 : vector<2x8x1xf32> to vector<2x8x8xf32>
    %131 = arith.subf %127, %130 : vector<2x8x8xf32>
    %132 = math.exp %131 : vector<2x8x8xf32>
    %cst_41 = arith.constant dense<0.000000e+00> : vector<2x8xf32>
    %133 = vector.multi_reduction <add>, %132, %cst_41 [2] : vector<2x8x8xf32> to vector<2x8xf32>
    %134 = vector.shape_cast %133 : vector<2x8xf32> to vector<2x8x1xf32>
    %135 = tpu.reciprocal %134 {approx = true} : vector<2x8x1xf32> -> vector<2x8x1xf32>
    %136 = vector.broadcast %135 : vector<2x8x1xf32> to vector<2x8x8xf32>
    %137 = arith.mulf %132, %136 : vector<2x8x8xf32>
    %138 = arith.truncf %137 : vector<2x8x8xf32> to vector<2x8x8xbf16>
    %139 = arith.truncf %123 : vector<2x8x8xf32> to vector<2x8x8xbf16>
    "tpu.trace_start"() <{level = 10 : i32, message = "bqk,bkd->bqd"}> : () -> ()
    %cst_42 = arith.constant dense<0.000000e+00> : vector<2x8x8xf32>
    %140 = tpu.matmul %138, %139, %cst_42 {dimension_numbers = #tpu.dot_dimension_numbers<[2], [1], [1], [2], [0, 0, 0, 1, 1, 2], [0], [0]>} : vector<2x8x8xbf16>, vector<2x8x8xbf16>, vector<2x8x8xf32> -> vector<2x8x8xf32>
    "tpu.trace_stop"() : () -> ()
    %141 = vector.shape_cast %140 : vector<2x8x8xf32> to vector<16x8xf32>
    %c0_43 = arith.constant 0 : index
    %c24 = arith.constant 24 : index
    %142 = vector.load %arg20[%c0_43, %c24] : memref<16x32xf32, #tpu.memory_space<vmem>>, vector<16x8xf32>
    tpu.vector_store %arg20[%c0_43, %c24], %141 {strides = array<i32>} : memref<16x32xf32, #tpu.memory_space<vmem>>, vector<16x8xf32>,
    %c0_44 = arith.constant 0 : index
    %c0_45 = arith.constant 0 : index
    %143 = vector.load %arg20[%c0_44, %c0_45] : memref<16x32xf32, #tpu.memory_space<vmem>>, vector<16x32xf32>
    %144 = arith.truncf %143 : vector<16x32xf32> to vector<16x32xbf16>
    %c0_46 = arith.constant 0 : index
    %c0_47 = arith.constant 0 : index
    %c0_48 = arith.constant 0 : index
    %145 = vector.load %arg9[%c0_46, %c0_47, %c0_48] : memref<1x32x32xbf16, #tpu.memory_space<vmem>>, vector<1x32x32xbf16>
    %146 = vector.shape_cast %145 : vector<1x32x32xbf16> to vector<32x32xbf16>
    %cst_49 = arith.constant dense<0.000000e+00> : vector<16x32xf32>
    %147 = tpu.matmul %144, %146, %cst_49 {dimension_numbers = #tpu.dot_dimension_numbers<[1], [0], [0], [1], [0, 0, 1, 1], [], []>} : vector<16x32xbf16>, vector<32x32xbf16>, vector<16x32xf32> -> vector<16x32xf32>
    %c0_50 = arith.constant 0 : index
    %c0_51 = arith.constant 0 : index
    %c0_52 = arith.constant 0 : index
    %148 = vector.load %arg10[%c0_50, %c0_51, %c0_52] : memref<1x1x32xf32, #tpu.memory_space<vmem>>, vector<1x1x32xf32>
    %149 = vector.shape_cast %148 : vector<1x1x32xf32> to vector<1x32xf32>
    %150 = vector.broadcast %149 : vector<1x32xf32> to vector<16x32xf32>
    %151 = arith.addf %147, %150 : vector<16x32xf32>
    %152 = arith.addf %4, %151 : vector<16x32xf32>
    %c0_53 = arith.constant 0 : index
    %c0_54 = arith.constant 0 : index
    %c0_55 = arith.constant 0 : index
    %153 = vector.load %arg13[%c0_53, %c0_54, %c0_55] : memref<1x1x32xf32, #tpu.memory_space<vmem>>, vector<1x1x32xf32>
    %154 = vector.shape_cast %153 : vector<1x1x32xf32> to vector<1x32xf32>
    %c0_56 = arith.constant 0 : index
    %c0_57 = arith.constant 0 : index
    %c0_58 = arith.constant 0 : index
    %155 = vector.load %arg14[%c0_56, %c0_57, %c0_58] : memref<1x1x32xf32, #tpu.memory_space<vmem>>, vector<1x1x32xf32>
    %156 = vector.shape_cast %155 : vector<1x1x32xf32> to vector<1x32xf32>
    %cst_59 = arith.constant dense<0.000000e+00> : vector<16xf32>
    %157 = vector.multi_reduction <add>, %152, %cst_59 [1] : vector<16x32xf32> to vector<16xf32>
    %158 = vector.shape_cast %157 : vector<16xf32> to vector<16x1xf32>
    %cst_60 = arith.constant 3.200000e+01 : f32
    %159 = vector.broadcast %cst_60 : f32 to vector<16x1xf32>
    %160 = arith.divf %158, %159 : vector<16x1xf32>
    %161 = vector.broadcast %160 : vector<16x1xf32> to vector<16x32xf32>
    %162 = arith.subf %152, %161 : vector<16x32xf32>
    %163 = arith.mulf %162, %162 : vector<16x32xf32>
    %cst_61 = arith.constant dense<0.000000e+00> : vector<16xf32>
    %164 = vector.multi_reduction <add>, %163, %cst_61 [1] : vector<16x32xf32> to vector<16xf32>
    %165 = vector.shape_cast %164 : vector<16xf32> to vector<16x1xf32>
    %cst_62 = arith.constant 3.100000e+01 : f32
    %166 = vector.broadcast %cst_62 : f32 to vector<16x1xf32>
    %167 = arith.divf %165, %166 : vector<16x1xf32>
    %168 = math.sqrt %167 : vector<16x1xf32>
    %cst_63 = arith.constant 9.99999997E-7 : f32
    %169 = vector.broadcast %cst_63 : f32 to vector<16x1xf32>
    %170 = arith.addf %168, %169 : vector<16x1xf32>
    %171 = tpu.reciprocal %170 {approx = true} : vector<16x1xf32> -> vector<16x1xf32>
    %172 = vector.broadcast %160 : vector<16x1xf32> to vector<16x32xf32>
    %173 = arith.subf %152, %172 : vector<16x32xf32>
    %174 = vector.broadcast %154 : vector<1x32xf32> to vector<16x32xf32>
    %175 = arith.mulf %174, %173 : vector<16x32xf32>
    %176 = vector.broadcast %171 : vector<16x1xf32> to vector<16x32xf32>
    %177 = arith.mulf %175, %176 : vector<16x32xf32>
    %178 = vector.broadcast %156 : vector<1x32xf32> to vector<16x32xf32>
    %179 = arith.addf %177, %178 : vector<16x32xf32>
    %180 = arith.truncf %179 : vector<16x32xf32> to vector<16x32xbf16>
    %c0_64 = arith.constant 0 : index
    %c0_65 = arith.constant 0 : index
    %c0_66 = arith.constant 0 : index
    %181 = vector.load %arg15[%c0_64, %c0_65, %c0_66] : memref<1x32x128xbf16, #tpu.memory_space<vmem>>, vector<1x32x128xbf16>
    %182 = vector.shape_cast %181 : vector<1x32x128xbf16> to vector<32x128xbf16>
    %cst_67 = arith.constant dense<0.000000e+00> : vector<16x128xf32>
    %183 = tpu.matmul %180, %182, %cst_67 {dimension_numbers = #tpu.dot_dimension_numbers<[1], [0], [0], [1], [0, 0, 1, 1], [], []>} : vector<16x32xbf16>, vector<32x128xbf16>, vector<16x128xf32> -> vector<16x128xf32>
    %c0_68 = arith.constant 0 : index
    %c0_69 = arith.constant 0 : index
    %c0_70 = arith.constant 0 : index
    %184 = vector.load %arg16[%c0_68, %c0_69, %c0_70] : memref<1x1x128xf32, #tpu.memory_space<vmem>>, vector<1x1x128xf32>
    %185 = vector.shape_cast %184 : vector<1x1x128xf32> to vector<1x128xf32>
    %186 = vector.broadcast %185 : vector<1x128xf32> to vector<16x128xf32>
    %187 = arith.addf %183, %186 : vector<16x128xf32>
    %cst_71 = arith.constant 5.000000e-01 : f32
    %188 = vector.broadcast %cst_71 : f32 to vector<16x128xf32>
    %189 = arith.mulf %188, %187 : vector<16x128xf32>
    %190 = arith.mulf %187, %187 : vector<16x128xf32>
    %191 = arith.mulf %187, %190 : vector<16x128xf32>
    %cst_72 = arith.constant 4.471500e-02 : f32
    %192 = vector.broadcast %cst_72 : f32 to vector<16x128xf32>
    %193 = arith.mulf %192, %191 : vector<16x128xf32>
    %194 = arith.addf %187, %193 : vector<16x128xf32>
    %cst_73 = arith.constant 0.797884583 : f32
    %195 = vector.broadcast %cst_73 : f32 to vector<16x128xf32>
    %196 = arith.mulf %195, %194 : vector<16x128xf32>
    %197 = math.tanh %196 : vector<16x128xf32>
    %cst_74 = arith.constant 1.000000e+00 : f32
    %198 = vector.broadcast %cst_74 : f32 to vector<16x128xf32>
    %199 = arith.addf %198, %197 : vector<16x128xf32>
    %200 = arith.mulf %189, %199 : vector<16x128xf32>
    %201 = arith.truncf %200 : vector<16x128xf32> to vector<16x128xbf16>
    %c0_75 = arith.constant 0 : index
    %c0_76 = arith.constant 0 : index
    %c0_77 = arith.constant 0 : index
    %202 = vector.load %arg17[%c0_75, %c0_76, %c0_77] : memref<1x128x32xbf16, #tpu.memory_space<vmem>>, vector<1x128x32xbf16>
    %203 = vector.shape_cast %202 : vector<1x128x32xbf16> to vector<128x32xbf16>
    %cst_78 = arith.constant dense<0.000000e+00> : vector<16x32xf32>
    %204 = tpu.matmul %201, %203, %cst_78 {dimension_numbers = #tpu.dot_dimension_numbers<[1], [0], [0], [1], [0, 0, 1, 1], [], []>} : vector<16x128xbf16>, vector<128x32xbf16>, vector<16x32xf32> -> vector<16x32xf32>
    %c0_79 = arith.constant 0 : index
    %c0_80 = arith.constant 0 : index
    %c0_81 = arith.constant 0 : index
    %205 = vector.load %arg18[%c0_79, %c0_80, %c0_81] : memref<1x1x32xf32, #tpu.memory_space<vmem>>, vector<1x1x32xf32>
    %206 = vector.shape_cast %205 : vector<1x1x32xf32> to vector<1x32xf32>
    %207 = vector.broadcast %206 : vector<1x32xf32> to vector<16x32xf32>
    %208 = arith.addf %204, %207 : vector<16x32xf32>
    %209 = arith.addf %152, %208 : vector<16x32xf32>
    %210 = vector.shape_cast %209 : vector<16x32xf32> to vector<2x8x32xf32>
    %c0_82 = arith.constant 0 : index
    %c0_83 = arith.constant 0 : index
    %c0_84 = arith.constant 0 : index
    %211 = vector.load %arg19[%c0_82, %c0_83, %c0_84] : memref<2x8x32xf32, #tpu.memory_space<vmem>>, vector<2x8x32xf32>
    tpu.vector_store %arg19[%c0_82, %c0_83, %c0_84], %210 {strides = array<i32>} : memref<2x8x32xf32, #tpu.memory_space<vmem>>, vector<2x8x32xf32>,
    return
  }
  func.func @transform_0(%arg0: i32, %arg1: i32) -> (i32, i32, i32) {
    %c0_i32 = arith.constant 0 : i32
    %c0_i32_0 = arith.constant 0 : i32
    %c0_i32_1 = arith.constant 0 : i32
    return %arg0, %c0_i32, %c0_i32_0 : i32, i32, i32
  }
  func.func @transform_1(%arg0: i32, %arg1: i32) -> (i32, i32, i32) {
    %c0_i32 = arith.constant 0 : i32
    %c0_i32_0 = arith.constant 0 : i32
    %c0_i32_1 = arith.constant 0 : i32
    return %arg0, %c0_i32, %c0_i32_0 : i32, i32, i32
  }
  func.func @transform_2(%arg0: i32, %arg1: i32) -> (i32, i32) {
    %c0_i32 = arith.constant 0 : i32
    %c0_i32_0 = arith.constant 0 : i32
    %c0_i32_1 = arith.constant 0 : i32
    return %c0_i32, %c0_i32_0 : i32, i32
  }
  func.func @transform_3(%arg0: i32, %arg1: i32) -> (i32, i32) {
    %c0_i32 = arith.constant 0 : i32
    %c0_i32_0 = arith.constant 0 : i32
    %c0_i32_1 = arith.constant 0 : i32
    return %c0_i32, %c0_i32_0 : i32, i32
  }
  func.func @transform_4(%arg0: i32, %arg1: i32) -> (i32, i32) {
    %c0_i32 = arith.constant 0 : i32
    %c0_i32_0 = arith.constant 0 : i32
    %c0_i32_1 = arith.constant 0 : i32
    return %c0_i32, %c0_i32_0 : i32, i32
  }
  func.func @transform_5(%arg0: i32, %arg1: i32) -> (i32, i32, i32) {
    %c0_i32 = arith.constant 0 : i32
    %c0_i32_0 = arith.constant 0 : i32
    %c0_i32_1 = arith.constant 0 : i32
    return %arg1, %c0_i32, %c0_i32_0 : i32, i32, i32
  }
  func.func @transform_6(%arg0: i32, %arg1: i32) -> (i32, i32, i32) {
    %c0_i32 = arith.constant 0 : i32
    %c0_i32_0 = arith.constant 0 : i32
    %c0_i32_1 = arith.constant 0 : i32
    return %arg1, %c0_i32, %c0_i32_0 : i32, i32, i32
  }
  func.func @transform_7(%arg0: i32, %arg1: i32) -> (i32, i32, i32) {
    %c0_i32 = arith.constant 0 : i32
    %c0_i32_0 = arith.constant 0 : i32
    %c0_i32_1 = arith.constant 0 : i32
    return %arg1, %c0_i32, %c0_i32_0 : i32, i32, i32
  }
  func.func @transform_8(%arg0: i32, %arg1: i32) -> (i32, i32, i32) {
    %c0_i32 = arith.constant 0 : i32
    %c0_i32_0 = arith.constant 0 : i32
    %c0_i32_1 = arith.constant 0 : i32
    return %arg1, %c0_i32, %c0_i32_0 : i32, i32, i32
  }
  func.func @transform_9(%arg0: i32, %arg1: i32) -> (i32, i32, i32) {
    %c0_i32 = arith.constant 0 : i32
    %c0_i32_0 = arith.constant 0 : i32
    %c0_i32_1 = arith.constant 0 : i32
    return %arg1, %c0_i32, %c0_i32_0 : i32, i32, i32
  }
  func.func @transform_10(%arg0: i32, %arg1: i32) -> (i32, i32, i32) {
    %c0_i32 = arith.constant 0 : i32
    %c0_i32_0 = arith.constant 0 : i32
    %c0_i32_1 = arith.constant 0 : i32
    return %arg1, %c0_i32, %c0_i32_0 : i32, i32, i32
  }
  func.func @transform_11(%arg0: i32, %arg1: i32) -> (i32, i32, i32) {
    %c0_i32 = arith.constant 0 : i32
    %c0_i32_0 = arith.constant 0 : i32
    %c0_i32_1 = arith.constant 0 : i32
    return %arg1, %c0_i32, %c0_i32_0 : i32, i32, i32
  }
  func.func @transform_12(%arg0: i32, %arg1: i32) -> (i32, i32, i32) {
    %c0_i32 = arith.constant 0 : i32
    %c0_i32_0 = arith.constant 0 : i32
    %c0_i32_1 = arith.constant 0 : i32
    return %arg1, %c0_i32, %c0_i32_0 : i32, i32, i32
  }
  func.func @transform_13(%arg0: i32, %arg1: i32) -> (i32, i32, i32) {
    %c0_i32 = arith.constant 0 : i32
    %c0_i32_0 = arith.constant 0 : i32
    %c0_i32_1 = arith.constant 0 : i32
    return %arg1, %c0_i32, %c0_i32_0 : i32, i32, i32
  }
  func.func @transform_14(%arg0: i32, %arg1: i32) -> (i32, i32, i32) {
    %c0_i32 = arith.constant 0 : i32
    %c0_i32_0 = arith.constant 0 : i32
    %c0_i32_1 = arith.constant 0 : i32
    return %arg1, %c0_i32, %c0_i32_0 : i32, i32, i32
  }
  func.func @transform_15(%arg0: i32, %arg1: i32) -> (i32, i32, i32) {
    %c0_i32 = arith.constant 0 : i32
    %c0_i32_0 = arith.constant 0 : i32
    %c0_i32_1 = arith.constant 0 : i32
    return %arg1, %c0_i32, %c0_i32_0 : i32, i32, i32
  }
  func.func @transform_16(%arg0: i32, %arg1: i32) -> (i32, i32, i32) {
    %c0_i32 = arith.constant 0 : i32
    %c0_i32_0 = arith.constant 0 : i32
    %c0_i32_1 = arith.constant 0 : i32
    return %arg1, %c0_i32, %c0_i32_0 : i32, i32, i32
  }
  func.func @transform_17(%arg0: i32, %arg1: i32) -> (i32, i32, i32) {
    %c0_i32 = arith.constant 0 : i32
    %c0_i32_0 = arith.constant 0 : i32
    %c0_i32_1 = arith.constant 0 : i32
    return %arg0, %c0_i32, %c0_i32_0 : i32, i32, i32
  }
}

</mosaic_0001>

<llo_original>
// kernel: tpu_custom_call.1
$region0: #{tpu_custom_call.1}
  #allocation0 [shape = 'u32[]', space=smem, size = 0x4, offset = 0x4, fixed_abs, tag = 'smem constant byte address 0x4 - core index']
  #allocation1 [shape = 'u32[72,128]{1,0:T(1,128)}', space=vmem, size = 0x9000, scoped, tag = 'internal scratch']
  #allocation2 [shape = 'f32[16,32]{1,0:T(8,128)}', space=vmem, size = 0x2000, scoped, tag = 'scratch operand']
  %s0 = inlined_call_operand.vmem [shape: f32[2,8,16], index: 0, kind: input, shape index: {}]
  %s1 = inlined_call_operand.vmem [shape: f32[2,1,8], index: 1, kind: input, shape index: {}]
  %s2 = inlined_call_operand.vmem [shape: f32[16,32], index: 2, kind: input, shape index: {}]
  %s3 = inlined_call_operand.vmem [shape: f32[1,32], index: 3, kind: input, shape index: {}]
  %s4 = inlined_call_operand.vmem [shape: f32[8,32], index: 4, kind: input, shape index: {}]
  %s5 = inlined_call_operand.vmem [shape: bf16[2,32,96], index: 5, kind: input, shape index: {}]
  %s6 = inlined_call_operand.vmem [shape: f32[2,1,96], index: 6, kind: input, shape index: {}]
  %s7 = inlined_call_operand.vmem [shape: bf16[2,32,32], index: 7, kind: input, shape index: {}]
  %s8 = inlined_call_operand.vmem [shape: f32[2,1,32], index: 8, kind: input, shape index: {}]
  %s9 = inlined_call_operand.vmem [shape: f32[2,1,32], index: 9, kind: input, shape index: {}]
  %s10 = inlined_call_operand.vmem [shape: f32[2,1,32], index: 10, kind: input, shape index: {}]
  %s11 = inlined_call_operand.vmem [shape: f32[2,1,32], index: 11, kind: input, shape index: {}]
  %s12 = inlined_call_operand.vmem [shape: f32[2,1,32], index: 12, kind: input, shape index: {}]
  %s13 = inlined_call_operand.vmem [shape: bf16[2,32,128], index: 13, kind: input, shape index: {}]
  %s14 = inlined_call_operand.vmem [shape: f32[2,1,128], index: 14, kind: input, shape index: {}]
  %s15 = inlined_call_operand.vmem [shape: bf16[2,128,32], index: 15, kind: input, shape index: {}]
  %s16 = inlined_call_operand.vmem [shape: f32[2,1,32], index: 16, kind: input, shape index: {}]
  %s17 = inlined_call_operand.hbm [shape: f32[2,8,32], index: 17, kind: output, shape index: {}]
  %s18 = sld [smem:[#allocation0]]
  $region105: #{tpu_custom_call.1} parent=0
    _
  %s20 = ssub.s32 1, %s18
  %s21 = scalar_select 0, %s20, %s18
  $region1: #{tpu_custom_call.1} parent=0
    #allocation3 [shape = 'u8[8192]{0}', space=vmem, size = 0x2000, scoped, tag = 'output window, operand 0, single buffered']
    #allocation4 [shape = 's32[2]{0}', space=sflag, size = 0x8, scoped, tag = 'scoped memory for tpu_custom_call.1']
    %22 = vsyncpa [#allocation4], 0
    loop: start=0, step=1, limit=4
    $region2: #{tpu_custom_call.1} parent=1 // loop_pre_header
      _
    $region3: #{tpu_custom_call.1} parent=1 // loop_header
      %s24 = sphi 0, %s28
      %p25 = scmp.ge.s32.totalorder %s24, 4
      %s31 = sphi 0, %s43
      %s32 = sphi 0, %s39
      %s33 = sphi 0, %s31
      %s34 = sphi 0, %s32
      %s35 = sphi 0, %s33
      %s36 = sphi 0, %s34
      %s46 = sphi 0, %s48
      %s49 = sphi 0, %s46
      %s50 = sphi 0, %s49
      %s66 = sphi 0, %s50
      %s72 = sphi 0, %s74
      %s75 = sphi 0, %s72
      %s76 = sphi 0, %s75
      %s92 = sphi 0, %s76
      %s96 = sphi 0, %s96
      %s98 = sphi 0, %s96
      %s99 = sphi 0, %s98
      %s113 = sphi 0, %s99
      %s117 = sphi 0, %s117
      %s119 = sphi 0, %s117
      %s120 = sphi 0, %s119
      %s134 = sphi 0, %s120
      %s138 = sphi 0, %s138
      %s140 = sphi 0, %s138
      %s141 = sphi 0, %s140
      %s155 = sphi 0, %s141
      %s161 = sphi 0, %s163
      %s164 = sphi 0, %s161
      %s165 = sphi 0, %s164
      %s181 = sphi 0, %s165
      %s187 = sphi 0, %s189
      %s190 = sphi 0, %s187
      %s191 = sphi 0, %s190
      %s207 = sphi 0, %s191
      %s213 = sphi 0, %s215
      %s216 = sphi 0, %s213
      %s217 = sphi 0, %s216
      %s233 = sphi 0, %s217
      %s239 = sphi 0, %s241
      %s242 = sphi 0, %s239
      %s243 = sphi 0, %s242
      %s259 = sphi 0, %s243
      %s265 = sphi 0, %s267
      %s268 = sphi 0, %s265
      %s269 = sphi 0, %s268
      %s285 = sphi 0, %s269
      %s291 = sphi 0, %s293
      %s294 = sphi 0, %s291
      %s295 = sphi 0, %s294
      %s311 = sphi 0, %s295
      %s317 = sphi 0, %s319
      %s320 = sphi 0, %s317
      %s321 = sphi 0, %s320
      %s337 = sphi 0, %s321
      %s343 = sphi 0, %s345
      %s346 = sphi 0, %s343
      %s347 = sphi 0, %s346
      %s363 = sphi 0, %s347
      %s369 = sphi 0, %s371
      %s372 = sphi 0, %s369
      %s373 = sphi 0, %s372
      %s389 = sphi 0, %s373
      %s395 = sphi 0, %s397
      %s398 = sphi 0, %s395
      %s399 = sphi 0, %s398
      %s415 = sphi 0, %s399
      %s421 = sphi 0, %s423
      %s424 = sphi 0, %s421
      %s425 = sphi 0, %s424
      %s441 = sphi 0, %s425
      %s447 = sphi 0, %s449
      %s450 = sphi 0, %s447
      %s451 = sphi 0, %s450
      %s467 = sphi 0, %s451
      %s473 = sphi 0, %s475
      %s476 = sphi 0, %s473
      %s477 = sphi 0, %s476
      %s493 = sphi 0, %s477
    $region4: #{tpu_custom_call.1} parent=1 // loop_header_branch
      %27 = sbr.rel (%p25) target = $region8
    $region5: #{tpu_custom_call.1} parent=1 // loop_body
      %s29 = ssub.s32 %s24, 1
      %s30 = ssub.s32 %s24, 2
      %s37 = sadd.s32 1, %s32
      %p38 = scmp.ge.s32.totalorder %s37, 2
      %s39 = scalar_select %p38, 0, %s37
      %s40 = sadd.s32 1, %s31
      %s41 = scalar_select %p38, %s40, %s31
      %p42 = scmp.ge.s32.totalorder %s41, 1
      %s43 = scalar_select %p42, 0, %s41
      %s44 = ssub.s32 %s31, %s43
      %p45 = scmp.eq.s32.totalorder %s44, 0
      %s47 = sadd.s32 %s46, 1
      %s48 = scalar_select %p45, %s46, %s47
      %p51 = pneg %p45
      %p52 = scmp.eq.s32.totalorder %s24, 1
      %p53 = por %p51, %p52
      %p54 = scmp.ne.s32.totalorder %s46, %s49
      %p55 = scmp.eq.s32.totalorder %s24, 0
      %p56 = por %p54, %p55
      %p57 = scmp.ne.s32.totalorder %s46, %s49
      %p58 = scmp.eq.s32.totalorder %s29, 1
      %p59 = por %p57, %p58
      %p60 = scmp.ne.s32.totalorder %s49, %s50
      %p61 = scmp.eq.s32.totalorder %s29, 0
      %p62 = por %p60, %p61
      %p63 = scmp.ne.s32.totalorder %s49, %s50
      %p64 = scmp.eq.s32.totalorder %s30, 1
      %p65 = por %p63, %p64
      %p67 = scmp.ne.s32.totalorder %s50, %s66
      %p68 = scmp.eq.s32.totalorder %s30, 0
      %p69 = por %p67, %p68
      %s70 = ssub.s32 %s31, %s43
      %p71 = scmp.eq.s32.totalorder %s70, 0
      %s73 = sadd.s32 %s72, 1
      %s74 = scalar_select %p71, %s72, %s73
      %p77 = pneg %p71
      %p78 = scmp.eq.s32.totalorder %s24, 1
      %p79 = por %p77, %p78
      %p80 = scmp.ne.s32.totalorder %s72, %s75
      %p81 = scmp.eq.s32.totalorder %s24, 0
      %p82 = por %p80, %p81
      %p83 = scmp.ne.s32.totalorder %s72, %s75
      %p84 = scmp.eq.s32.totalorder %s29, 1
      %p85 = por %p83, %p84
      %p86 = scmp.ne.s32.totalorder %s75, %s76
      %p87 = scmp.eq.s32.totalorder %s29, 0
      %p88 = por %p86, %p87
      %p89 = scmp.ne.s32.totalorder %s75, %s76
      %p90 = scmp.eq.s32.totalorder %s30, 1
      %p91 = por %p89, %p90
      %p93 = scmp.ne.s32.totalorder %s76, %s92
      %p94 = scmp.eq.s32.totalorder %s30, 0
      %p95 = por %p93, %p94
      %s97 = sadd.s32 %s96, 1
      %p100 = scmp.eq.s32.totalorder %s24, 1
      %p101 = scmp.ne.s32.totalorder %s96, %s98
      %p102 = scmp.eq.s32.totalorder %s24, 0
      %p103 = por %p101, %p102
      %p104 = scmp.ne.s32.totalorder %s96, %s98
      %p105 = scmp.eq.s32.totalorder %s29, 1
      %p106 = por %p104, %p105
      %p107 = scmp.ne.s32.totalorder %s98, %s99
      %p108 = scmp.eq.s32.totalorder %s29, 0
      %p109 = por %p107, %p108
      %p110 = scmp.ne.s32.totalorder %s98, %s99
      %p111 = scmp.eq.s32.totalorder %s30, 1
      %p112 = por %p110, %p111
      %p114 = scmp.ne.s32.totalorder %s99, %s113
      %p115 = scmp.eq.s32.totalorder %s30, 0
      %p116 = por %p114, %p115
      %s118 = sadd.s32 %s117, 1
      %p121 = scmp.eq.s32.totalorder %s24, 1
      %p122 = scmp.ne.s32.totalorder %s117, %s119
      %p123 = scmp.eq.s32.totalorder %s24, 0
      %p124 = por %p122, %p123
      %p125 = scmp.ne.s32.totalorder %s117, %s119
      %p126 = scmp.eq.s32.totalorder %s29, 1
      %p127 = por %p125, %p126
      %p128 = scmp.ne.s32.totalorder %s119, %s120
      %p129 = scmp.eq.s32.totalorder %s29, 0
      %p130 = por %p128, %p129
      %p131 = scmp.ne.s32.totalorder %s119, %s120
      %p132 = scmp.eq.s32.totalorder %s30, 1
      %p133 = por %p131, %p132
      %p135 = scmp.ne.s32.totalorder %s120, %s134
      %p136 = scmp.eq.s32.totalorder %s30, 0
      %p137 = por %p135, %p136
      %s139 = sadd.s32 %s138, 1
      %p142 = scmp.eq.s32.totalorder %s24, 1
      %p143 = scmp.ne.s32.totalorder %s138, %s140
      %p144 = scmp.eq.s32.totalorder %s24, 0
      %p145 = por %p143, %p144
      %p146 = scmp.ne.s32.totalorder %s138, %s140
      %p147 = scmp.eq.s32.totalorder %s29, 1
      %p148 = por %p146, %p147
      %p149 = scmp.ne.s32.totalorder %s140, %s141
      %p150 = scmp.eq.s32.totalorder %s29, 0
      %p151 = por %p149, %p150
      %p152 = scmp.ne.s32.totalorder %s140, %s141
      %p153 = scmp.eq.s32.totalorder %s30, 1
      %p154 = por %p152, %p153
      %p156 = scmp.ne.s32.totalorder %s141, %s155
      %p157 = scmp.eq.s32.totalorder %s30, 0
      %p158 = por %p156, %p157
      %s159 = ssub.s32 %s32, %s39
      %p160 = scmp.eq.s32.totalorder %s159, 0
      %s162 = sadd.s32 %s161, 1
      %s163 = scalar_select %p160, %s161, %s162
      %p166 = pneg %p160
      %p167 = scmp.eq.s32.totalorder %s24, 1
      %p168 = por %p166, %p167
      %p169 = scmp.ne.s32.totalorder %s161, %s164
      %p170 = scmp.eq.s32.totalorder %s24, 0
      %p171 = por %p169, %p170
      %p172 = scmp.ne.s32.totalorder %s161, %s164
      %p173 = scmp.eq.s32.totalorder %s29, 1
      %p174 = por %p172, %p173
      %p175 = scmp.ne.s32.totalorder %s164, %s165
      %p176 = scmp.eq.s32.totalorder %s29, 0
      %p177 = por %p175, %p176
      %p178 = scmp.ne.s32.totalorder %s164, %s165
      %p179 = scmp.eq.s32.totalorder %s30, 1
      %p180 = por %p178, %p179
      %p182 = scmp.ne.s32.totalorder %s165, %s181
      %p183 = scmp.eq.s32.totalorder %s30, 0
      %p184 = por %p182, %p183
      %s185 = ssub.s32 %s32, %s39
      %p186 = scmp.eq.s32.totalorder %s185, 0
      %s188 = sadd.s32 %s187, 1
      %s189 = scalar_select %p186, %s187, %s188
      %p192 = pneg %p186
      %p193 = scmp.eq.s32.totalorder %s24, 1
      %p194 = por %p192, %p193
      %p195 = scmp.ne.s32.totalorder %s187, %s190
      %p196 = scmp.eq.s32.totalorder %s24, 0
      %p197 = por %p195, %p196
      %p198 = scmp.ne.s32.totalorder %s187, %s190
      %p199 = scmp.eq.s32.totalorder %s29, 1
      %p200 = por %p198, %p199
      %p201 = scmp.ne.s32.totalorder %s190, %s191
      %p202 = scmp.eq.s32.totalorder %s29, 0
      %p203 = por %p201, %p202
      %p204 = scmp.ne.s32.totalorder %s190, %s191
      %p205 = scmp.eq.s32.totalorder %s30, 1
      %p206 = por %p204, %p205
      %p208 = scmp.ne.s32.totalorder %s191, %s207
      %p209 = scmp.eq.s32.totalorder %s30, 0
      %p210 = por %p208, %p209
      %s211 = ssub.s32 %s32, %s39
      %p212 = scmp.eq.s32.totalorder %s211, 0
      %s214 = sadd.s32 %s213, 1
      %s215 = scalar_select %p212, %s213, %s214
      %p218 = pneg %p212
      %p219 = scmp.eq.s32.totalorder %s24, 1
      %p220 = por %p218, %p219
      %p221 = scmp.ne.s32.totalorder %s213, %s216
      %p222 = scmp.eq.s32.totalorder %s24, 0
      %p223 = por %p221, %p222
      %p224 = scmp.ne.s32.totalorder %s213, %s216
      %p225 = scmp.eq.s32.totalorder %s29, 1
      %p226 = por %p224, %p225
      %p227 = scmp.ne.s32.totalorder %s216, %s217
      %p228 = scmp.eq.s32.totalorder %s29, 0
      %p229 = por %p227, %p228
      %p230 = scmp.ne.s32.totalorder %s216, %s217
      %p231 = scmp.eq.s32.totalorder %s30, 1
      %p232 = por %p230, %p231
      %p234 = scmp.ne.s32.totalorder %s217, %s233
      %p235 = scmp.eq.s32.totalorder %s30, 0
      %p236 = por %p234, %p235
      %s237 = ssub.s32 %s32, %s39
      %p238 = scmp.eq.s32.totalorder %s237, 0
      %s240 = sadd.s32 %s239, 1
      %s241 = scalar_select %p238, %s239, %s240
      %p244 = pneg %p238
      %p245 = scmp.eq.s32.totalorder %s24, 1
      %p246 = por %p244, %p245
      %p247 = scmp.ne.s32.totalorder %s239, %s242
      %p248 = scmp.eq.s32.totalorder %s24, 0
      %p249 = por %p247, %p248
      %p250 = scmp.ne.s32.totalorder %s239, %s242
      %p251 = scmp.eq.s32.totalorder %s29, 1
      %p252 = por %p250, %p251
      %p253 = scmp.ne.s32.totalorder %s242, %s243
      %p254 = scmp.eq.s32.totalorder %s29, 0
      %p255 = por %p253, %p254
      %p256 = scmp.ne.s32.totalorder %s242, %s243
      %p257 = scmp.eq.s32.totalorder %s30, 1
      %p258 = por %p256, %p257
      %p260 = scmp.ne.s32.totalorder %s243, %s259
      %p261 = scmp.eq.s32.totalorder %s30, 0
      %p262 = por %p260, %p261
      %s263 = ssub.s32 %s32, %s39
      %p264 = scmp.eq.s32.totalorder %s263, 0
      %s266 = sadd.s32 %s265, 1
      %s267 = scalar_select %p264, %s265, %s266
      %p270 = pneg %p264
      %p271 = scmp.eq.s32.totalorder %s24, 1
      %p272 = por %p270, %p271
      %p273 = scmp.ne.s32.totalorder %s265, %s268
      %p274 = scmp.eq.s32.totalorder %s24, 0
      %p275 = por %p273, %p274
      %p276 = scmp.ne.s32.totalorder %s265, %s268
      %p277 = scmp.eq.s32.totalorder %s29, 1
      %p278 = por %p276, %p277
      %p279 = scmp.ne.s32.totalorder %s268, %s269
      %p280 = scmp.eq.s32.totalorder %s29, 0
      %p281 = por %p279, %p280
      %p282 = scmp.ne.s32.totalorder %s268, %s269
      %p283 = scmp.eq.s32.totalorder %s30, 1
      %p284 = por %p282, %p283
      %p286 = scmp.ne.s32.totalorder %s269, %s285
      %p287 = scmp.eq.s32.totalorder %s30, 0
      %p288 = por %p286, %p287
      %s289 = ssub.s32 %s32, %s39
      %p290 = scmp.eq.s32.totalorder %s289, 0
      %s292 = sadd.s32 %s291, 1
      %s293 = scalar_select %p290, %s291, %s292
      %p296 = pneg %p290
      %p297 = scmp.eq.s32.totalorder %s24, 1
      %p298 = por %p296, %p297
      %p299 = scmp.ne.s32.totalorder %s291, %s294
      %p300 = scmp.eq.s32.totalorder %s24, 0
      %p301 = por %p299, %p300
      %p302 = scmp.ne.s32.totalorder %s291, %s294
      %p303 = scmp.eq.s32.totalorder %s29, 1
      %p304 = por %p302, %p303
      %p305 = scmp.ne.s32.totalorder %s294, %s295
      %p306 = scmp.eq.s32.totalorder %s29, 0
      %p307 = por %p305, %p306
      %p308 = scmp.ne.s32.totalorder %s294, %s295
      %p309 = scmp.eq.s32.totalorder %s30, 1
      %p310 = por %p308, %p309
      %p312 = scmp.ne.s32.totalorder %s295, %s311
      %p313 = scmp.eq.s32.totalorder %s30, 0
      %p314 = por %p312, %p313
      %s315 = ssub.s32 %s32, %s39
      %p316 = scmp.eq.s32.totalorder %s315, 0
      %s318 = sadd.s32 %s317, 1
      %s319 = scalar_select %p316, %s317, %s318
      %p322 = pneg %p316
      %p323 = scmp.eq.s32.totalorder %s24, 1
      %p324 = por %p322, %p323
      %p325 = scmp.ne.s32.totalorder %s317, %s320
      %p326 = scmp.eq.s32.totalorder %s24, 0
      %p327 = por %p325, %p326
      %p328 = scmp.ne.s32.totalorder %s317, %s320
      %p329 = scmp.eq.s32.totalorder %s29, 1
      %p330 = por %p328, %p329
      %p331 = scmp.ne.s32.totalorder %s320, %s321
      %p332 = scmp.eq.s32.totalorder %s29, 0
      %p333 = por %p331, %p332
      %p334 = scmp.ne.s32.totalorder %s320, %s321
      %p335 = scmp.eq.s32.totalorder %s30, 1
      %p336 = por %p334, %p335
      %p338 = scmp.ne.s32.totalorder %s321, %s337
      %p339 = scmp.eq.s32.totalorder %s30, 0
      %p340 = por %p338, %p339
      %s341 = ssub.s32 %s32, %s39
      %p342 = scmp.eq.s32.totalorder %s341, 0
      %s344 = sadd.s32 %s343, 1
      %s345 = scalar_select %p342, %s343, %s344
      %p348 = pneg %p342
      %p349 = scmp.eq.s32.totalorder %s24, 1
      %p350 = por %p348, %p349
      %p351 = scmp.ne.s32.totalorder %s343, %s346
      %p352 = scmp.eq.s32.totalorder %s24, 0
      %p353 = por %p351, %p352
      %p354 = scmp.ne.s32.totalorder %s343, %s346
      %p355 = scmp.eq.s32.totalorder %s29, 1
      %p356 = por %p354, %p355
      %p357 = scmp.ne.s32.totalorder %s346, %s347
      %p358 = scmp.eq.s32.totalorder %s29, 0
      %p359 = por %p357, %p358
      %p360 = scmp.ne.s32.totalorder %s346, %s347
      %p361 = scmp.eq.s32.totalorder %s30, 1
      %p362 = por %p360, %p361
      %p364 = scmp.ne.s32.totalorder %s347, %s363
      %p365 = scmp.eq.s32.totalorder %s30, 0
      %p366 = por %p364, %p365
      %s367 = ssub.s32 %s32, %s39
      %p368 = scmp.eq.s32.totalorder %s367, 0
      %s370 = sadd.s32 %s369, 1
      %s371 = scalar_select %p368, %s369, %s370
      %p374 = pneg %p368
      %p375 = scmp.eq.s32.totalorder %s24, 1
      %p376 = por %p374, %p375
      %p377 = scmp.ne.s32.totalorder %s369, %s372
      %p378 = scmp.eq.s32.totalorder %s24, 0
      %p379 = por %p377, %p378
      %p380 = scmp.ne.s32.totalorder %s369, %s372
      %p381 = scmp.eq.s32.totalorder %s29, 1
      %p382 = por %p380, %p381
      %p383 = scmp.ne.s32.totalorder %s372, %s373
      %p384 = scmp.eq.s32.totalorder %s29, 0
      %p385 = por %p383, %p384
      %p386 = scmp.ne.s32.totalorder %s372, %s373
      %p387 = scmp.eq.s32.totalorder %s30, 1
      %p388 = por %p386, %p387
      %p390 = scmp.ne.s32.totalorder %s373, %s389
      %p391 = scmp.eq.s32.totalorder %s30, 0
      %p392 = por %p390, %p391
      %s393 = ssub.s32 %s32, %s39
      %p394 = scmp.eq.s32.totalorder %s393, 0
      %s396 = sadd.s32 %s395, 1
      %s397 = scalar_select %p394, %s395, %s396
      %p400 = pneg %p394
      %p401 = scmp.eq.s32.totalorder %s24, 1
      %p402 = por %p400, %p401
      %p403 = scmp.ne.s32.totalorder %s395, %s398
      %p404 = scmp.eq.s32.totalorder %s24, 0
      %p405 = por %p403, %p404
      %p406 = scmp.ne.s32.totalorder %s395, %s398
      %p407 = scmp.eq.s32.totalorder %s29, 1
      %p408 = por %p406, %p407
      %p409 = scmp.ne.s32.totalorder %s398, %s399
      %p410 = scmp.eq.s32.totalorder %s29, 0
      %p411 = por %p409, %p410
      %p412 = scmp.ne.s32.totalorder %s398, %s399
      %p413 = scmp.eq.s32.totalorder %s30, 1
      %p414 = por %p412, %p413
      %p416 = scmp.ne.s32.totalorder %s399, %s415
      %p417 = scmp.eq.s32.totalorder %s30, 0
      %p418 = por %p416, %p417
      %s419 = ssub.s32 %s32, %s39
      %p420 = scmp.eq.s32.totalorder %s419, 0
      %s422 = sadd.s32 %s421, 1
      %s423 = scalar_select %p420, %s421, %s422
      %p426 = pneg %p420
      %p427 = scmp.eq.s32.totalorder %s24, 1
      %p428 = por %p426, %p427
      %p429 = scmp.ne.s32.totalorder %s421, %s424
      %p430 = scmp.eq.s32.totalorder %s24, 0
      %p431 = por %p429, %p430
      %p432 = scmp.ne.s32.totalorder %s421, %s424
      %p433 = scmp.eq.s32.totalorder %s29, 1
      %p434 = por %p432, %p433
      %p435 = scmp.ne.s32.totalorder %s424, %s425
      %p436 = scmp.eq.s32.totalorder %s29, 0
      %p437 = por %p435, %p436
      %p438 = scmp.ne.s32.totalorder %s424, %s425
      %p439 = scmp.eq.s32.totalorder %s30, 1
      %p440 = por %p438, %p439
      %p442 = scmp.ne.s32.totalorder %s425, %s441
      %p443 = scmp.eq.s32.totalorder %s30, 0
      %p444 = por %p442, %p443
      %s445 = ssub.s32 %s32, %s39
      %p446 = scmp.eq.s32.totalorder %s445, 0
      %s448 = sadd.s32 %s447, 1
      %s449 = scalar_select %p446, %s447, %s448
      %p452 = pneg %p446
      %p453 = scmp.eq.s32.totalorder %s24, 1
      %p454 = por %p452, %p453
      %p455 = scmp.ne.s32.totalorder %s447, %s450
      %p456 = scmp.eq.s32.totalorder %s24, 0
      %p457 = por %p455, %p456
      %p458 = scmp.ne.s32.totalorder %s447, %s450
      %p459 = scmp.eq.s32.totalorder %s29, 1
      %p460 = por %p458, %p459
      %p461 = scmp.ne.s32.totalorder %s450, %s451
      %p462 = scmp.eq.s32.totalorder %s29, 0
      %p463 = por %p461, %p462
      %p464 = scmp.ne.s32.totalorder %s450, %s451
      %p465 = scmp.eq.s32.totalorder %s30, 1
      %p466 = por %p464, %p465
      %p468 = scmp.ne.s32.totalorder %s451, %s467
      %p469 = scmp.eq.s32.totalorder %s30, 0
      %p470 = por %p468, %p469
      %s471 = ssub.s32 %s31, %s43
      %p472 = scmp.eq.s32.totalorder %s471, 0
      %s474 = sadd.s32 %s473, 1
      %s475 = scalar_select %p472, %s473, %s474
      %p478 = pneg %p472
      %p479 = scmp.eq.s32.totalorder %s24, 1
      %p480 = por %p478, %p479
      %p481 = scmp.ne.s32.totalorder %s473, %s476
      %p482 = scmp.eq.s32.totalorder %s24, 0
      %p483 = por %p481, %p482
      %p484 = scmp.ne.s32.totalorder %s473, %s476
      %p485 = scmp.eq.s32.totalorder %s29, 1
      %p486 = por %p484, %p485
      %p487 = scmp.ne.s32.totalorder %s476, %s477
      %p488 = scmp.eq.s32.totalorder %s29, 0
      %p489 = por %p487, %p488
      %p490 = scmp.ne.s32.totalorder %s476, %s477
      %p491 = scmp.eq.s32.totalorder %s30, 1
      %p492 = por %p490, %p491
      %p494 = scmp.ne.s32.totalorder %s477, %s493
      %p495 = scmp.eq.s32.totalorder %s30, 0
      %p496 = por %p494, %p495
      %p497 = scmp.le.s32.totalorder 1, %s24
      %p498 = scmp.lt.s32.totalorder %s24, 3
      %p499 = pnand %p497, %p498
      %p500 = pneg %p499
      // Predicated region
      $region9: #{tpu_custom_call.1} parent=5 // pred_check
        _
      $region10: #{tpu_custom_call.1} parent=5 // pred_check_branch
        %502 = sbr.rel (%p499) target = $region12
      $region11: #{tpu_custom_call.1} parent=5 // pred_region
        %s503 = ssub.s32 %s24, 1
        // Predicated region
        $region13: #{tpu_custom_call.1} parent=11 // pred_check
          %p504 = pneg %p62
        $region14: #{tpu_custom_call.1} parent=11 // pred_check_branch
          %506 = sbr.rel (%p504) target = $region16
        $region15: #{tpu_custom_call.1} parent=11 // pred_region
          %s507 = smul.u32 2, %s33
          %p508 = scmp.lt.s32.totalorder %s507, 1
          %s509 = scalar_select %p508, %s507, 1
          %s510 = smul.addr %s509, 8
          %s511 = scalar_lea.vmem %s0, %s510
          %s512 = smul.u32 2, %s33
        $region16: #{tpu_custom_call.1} parent=11 // pred_fallthru
          _
        // Predicated region
        $region17: #{tpu_custom_call.1} parent=11 // pred_check
          %p513 = pneg %p88
        $region18: #{tpu_custom_call.1} parent=11 // pred_check_branch
          %515 = sbr.rel (%p513) target = $region20
        $region19: #{tpu_custom_call.1} parent=11 // pred_region
          %s516 = smul.u32 2, %s33
          %p517 = scmp.lt.s32.totalorder %s516, 1
          %s518 = scalar_select %p517, %s516, 1
          %s519 = scalar_lea.vmem %s1, %s518
          %s520 = smul.u32 2, %s33
        $region20: #{tpu_custom_call.1} parent=11 // pred_fallthru
          _
        // Predicated region
        $region21: #{tpu_custom_call.1} parent=11 // pred_check
          %p521 = pneg %p109
        $region22: #{tpu_custom_call.1} parent=11 // pred_check_branch
          %523 = sbr.rel (%p521) target = $region24
        $region23: #{tpu_custom_call.1} parent=11 // pred_region
          _
        $region24: #{tpu_custom_call.1} parent=11 // pred_fallthru
          _
        // Predicated region
        $region25: #{tpu_custom_call.1} parent=11 // pred_check
          %p524 = pneg %p130
        $region26: #{tpu_custom_call.1} parent=11 // pred_check_branch
          %526 = sbr.rel (%p524) target = $region28
        $region27: #{tpu_custom_call.1} parent=11 // pred_region
          _
        $region28: #{tpu_custom_call.1} parent=11 // pred_fallthru
          _
        // Predicated region
        $region29: #{tpu_custom_call.1} parent=11 // pred_check
          %p527 = pneg %p151
        $region30: #{tpu_custom_call.1} parent=11 // pred_check_branch
          %529 = sbr.rel (%p527) target = $region32
        $region31: #{tpu_custom_call.1} parent=11 // pred_region
          _
        $region32: #{tpu_custom_call.1} parent=11 // pred_fallthru
          _
      $region12: #{tpu_custom_call.1} parent=5 // pred_fallthru
        _
      %p530 = scmp.lt.s32.totalorder %s24, 2
      // Predicated region
      $region33: #{tpu_custom_call.1} parent=5 // pred_check
        %p531 = pneg %p530
      $region34: #{tpu_custom_call.1} parent=5 // pred_check_branch
        %533 = sbr.rel (%p531) target = $region36
      $region35: #{tpu_custom_call.1} parent=5 // pred_region
        // Predicated region
        $region37: #{tpu_custom_call.1} parent=35 // pred_check
          %p534 = pneg %p171
        $region38: #{tpu_custom_call.1} parent=35 // pred_check_branch
          %536 = sbr.rel (%p534) target = $region40
        $region39: #{tpu_custom_call.1} parent=35 // pred_region
          %p537 = scmp.lt.s32.totalorder %s32, 1
          %s538 = scalar_select %p537, %s32, 1
          %s539 = smul.addr %s538, 4
          %s540 = smul.addr %s539, 4
          %s541 = scalar_lea.vmem %s5, %s540
        $region40: #{tpu_custom_call.1} parent=35 // pred_fallthru
          _
        // Predicated region
        $region41: #{tpu_custom_call.1} parent=35 // pred_check
          %p542 = pneg %p197
        $region42: #{tpu_custom_call.1} parent=35 // pred_check_branch
          %544 = sbr.rel (%p542) target = $region44
        $region43: #{tpu_custom_call.1} parent=35 // pred_region
          %p545 = scmp.lt.s32.totalorder %s32, 1
          %s546 = scalar_select %p545, %s32, 1
          %s547 = scalar_lea.vmem %s6, %s546
        $region44: #{tpu_custom_call.1} parent=35 // pred_fallthru
          _
        // Predicated region
        $region45: #{tpu_custom_call.1} parent=35 // pred_check
          %p548 = pneg %p223
        $region46: #{tpu_custom_call.1} parent=35 // pred_check_branch
          %550 = sbr.rel (%p548) target = $region48
        $region47: #{tpu_custom_call.1} parent=35 // pred_region
          %p551 = scmp.lt.s32.totalorder %s32, 1
          %s552 = scalar_select %p551, %s32, 1
          %s553 = smul.addr %s552, 4
          %s554 = smul.addr %s553, 4
          %s555 = scalar_lea.vmem %s7, %s554
        $region48: #{tpu_custom_call.1} parent=35 // pred_fallthru
          _
        // Predicated region
        $region49: #{tpu_custom_call.1} parent=35 // pred_check
          %p556 = pneg %p249
        $region50: #{tpu_custom_call.1} parent=35 // pred_check_branch
          %558 = sbr.rel (%p556) target = $region52
        $region51: #{tpu_custom_call.1} parent=35 // pred_region
          %p559 = scmp.lt.s32.totalorder %s32, 1
          %s560 = scalar_select %p559, %s32, 1
          %s561 = scalar_lea.vmem %s8, %s560
        $region52: #{tpu_custom_call.1} parent=35 // pred_fallthru
          _
        // Predicated region
        $region53: #{tpu_custom_call.1} parent=35 // pred_check
          %p562 = pneg %p275
        $region54: #{tpu_custom_call.1} parent=35 // pred_check_branch
          %564 = sbr.rel (%p562) target = $region56
        $region55: #{tpu_custom_call.1} parent=35 // pred_region
          %p565 = scmp.lt.s32.totalorder %s32, 1
          %s566 = scalar_select %p565, %s32, 1
          %s567 = scalar_lea.vmem %s9, %s566
        $region56: #{tpu_custom_call.1} parent=35 // pred_fallthru
          _
        // Predicated region
        $region57: #{tpu_custom_call.1} parent=35 // pred_check
          %p568 = pneg %p301
        $region58: #{tpu_custom_call.1} parent=35 // pred_check_branch
          %570 = sbr.rel (%p568) target = $region60
        $region59: #{tpu_custom_call.1} parent=35 // pred_region
          %p571 = scmp.lt.s32.totalorder %s32, 1
          %s572 = scalar_select %p571, %s32, 1
          %s573 = scalar_lea.vmem %s10, %s572
        $region60: #{tpu_custom_call.1} parent=35 // pred_fallthru
          _
        // Predicated region
        $region61: #{tpu_custom_call.1} parent=35 // pred_check
          %p574 = pneg %p327
        $region62: #{tpu_custom_call.1} parent=35 // pred_check_branch
          %576 = sbr.rel (%p574) target = $region64
        $region63: #{tpu_custom_call.1} parent=35 // pred_region
          %p577 = scmp.lt.s32.totalorder %s32, 1
          %s578 = scalar_select %p577, %s32, 1
          %s579 = scalar_lea.vmem %s11, %s578
        $region64: #{tpu_custom_call.1} parent=35 // pred_fallthru
          _
        // Predicated region
        $region65: #{tpu_custom_call.1} parent=35 // pred_check
          %p580 = pneg %p353
        $region66: #{tpu_custom_call.1} parent=35 // pred_check_branch
          %582 = sbr.rel (%p580) target = $region68
        $region67: #{tpu_custom_call.1} parent=35 // pred_region
          %p583 = scmp.lt.s32.totalorder %s32, 1
          %s584 = scalar_select %p583, %s32, 1
          %s585 = scalar_lea.vmem %s12, %s584
        $region68: #{tpu_custom_call.1} parent=35 // pred_fallthru
          _
        // Predicated region
        $region69: #{tpu_custom_call.1} parent=35 // pred_check
          %p586 = pneg %p379
        $region70: #{tpu_custom_call.1} parent=35 // pred_check_branch
          %588 = sbr.rel (%p586) target = $region72
        $region71: #{tpu_custom_call.1} parent=35 // pred_region
          %p589 = scmp.lt.s32.totalorder %s32, 1
          %s590 = scalar_select %p589, %s32, 1
          %s591 = smul.addr %s590, 4
          %s592 = smul.addr %s591, 4
          %s593 = scalar_lea.vmem %s13, %s592
        $region72: #{tpu_custom_call.1} parent=35 // pred_fallthru
          _
        // Predicated region
        $region73: #{tpu_custom_call.1} parent=35 // pred_check
          %p594 = pneg %p405
        $region74: #{tpu_custom_call.1} parent=35 // pred_check_branch
          %596 = sbr.rel (%p594) target = $region76
        $region75: #{tpu_custom_call.1} parent=35 // pred_region
          %p597 = scmp.lt.s32.totalorder %s32, 1
          %s598 = scalar_select %p597, %s32, 1
          %s599 = scalar_lea.vmem %s14, %s598
        $region76: #{tpu_custom_call.1} parent=35 // pred_fallthru
          _
        // Predicated region
        $region77: #{tpu_custom_call.1} parent=35 // pred_check
          %p600 = pneg %p431
        $region78: #{tpu_custom_call.1} parent=35 // pred_check_branch
          %602 = sbr.rel (%p600) target = $region80
        $region79: #{tpu_custom_call.1} parent=35 // pred_region
          %p603 = scmp.lt.s32.totalorder %s32, 1
          %s604 = scalar_select %p603, %s32, 1
          %s605 = smul.addr %s604, 16
          %s606 = smul.addr %s605, 4
          %s607 = scalar_lea.vmem %s15, %s606
        $region80: #{tpu_custom_call.1} parent=35 // pred_fallthru
          _
        // Predicated region
        $region81: #{tpu_custom_call.1} parent=35 // pred_check
          %p608 = pneg %p457
        $region82: #{tpu_custom_call.1} parent=35 // pred_check_branch
          %610 = sbr.rel (%p608) target = $region84
        $region83: #{tpu_custom_call.1} parent=35 // pred_region
          %p611 = scmp.lt.s32.totalorder %s32, 1
          %s612 = scalar_select %p611, %s32, 1
          %s613 = scalar_lea.vmem %s16, %s612
        $region84: #{tpu_custom_call.1} parent=35 // pred_fallthru
          _
      $region36: #{tpu_custom_call.1} parent=5 // pred_fallthru
        _
      %p614 = scmp.le.s32.totalorder 1, %s24
      %p615 = scmp.lt.s32.totalorder %s24, 3
      %p616 = pnand %p614, %p615
      %p617 = pneg %p616
      // Predicated region
      $region85: #{tpu_custom_call.1} parent=5 // pred_check
        _
      $region86: #{tpu_custom_call.1} parent=5 // pred_check_branch
        %619 = sbr.rel (%p616) target = $region88
      $region87: #{tpu_custom_call.1} parent=5 // pred_region
        %s620 = ssub.s32 %s24, 1
        %s621 = smul.u32 2, %s33
        %p622 = scmp.lt.s32.totalorder %s621, 1
        %s623 = scalar_select %p622, %s621, 1
        %s624 = smul.addr %s623, 8
        %s625 = scalar_lea.vmem %s0, %s624
        %p626 = pneg %p62
        %p627 = pneg %p59
        %s628 = smul.u32 2, %s33
        %p629 = scmp.lt.s32.totalorder %s628, 1
        %s630 = scalar_select %p629, %s628, 1
        %s631 = scalar_lea.vmem %s1, %s630
        %p632 = pneg %p88
        %p633 = pneg %p85
        %p634 = pneg %p109
        %p635 = pneg %p106
        %p636 = pneg %p130
        %p637 = pneg %p127
        %p638 = pneg %p151
        %p639 = pneg %p148
        %p640 = scmp.lt.s32.totalorder %s34, 1
        %s641 = scalar_select %p640, %s34, 1
        %s642 = smul.addr %s641, 4
        %s643 = smul.addr %s642, 4
        %s644 = scalar_lea.vmem %s5, %s643
        %p645 = pneg %p177
        %p646 = pneg %p174
        %p647 = scmp.lt.s32.totalorder %s34, 1
        %s648 = scalar_select %p647, %s34, 1
        %s649 = scalar_lea.vmem %s6, %s648
        %p650 = pneg %p203
        %p651 = pneg %p200
        %p652 = scmp.lt.s32.totalorder %s34, 1
        %s653 = scalar_select %p652, %s34, 1
        %s654 = smul.addr %s653, 4
        %s655 = smul.addr %s654, 4
        %s656 = scalar_lea.vmem %s7, %s655
        %p657 = pneg %p229
        %p658 = pneg %p226
        %p659 = scmp.lt.s32.totalorder %s34, 1
        %s660 = scalar_select %p659, %s34, 1
        %s661 = scalar_lea.vmem %s8, %s660
        %p662 = pneg %p255
        %p663 = pneg %p252
        %p664 = scmp.lt.s32.totalorder %s34, 1
        %s665 = scalar_select %p664, %s34, 1
        %s666 = scalar_lea.vmem %s9, %s665
        %p667 = pneg %p281
        %p668 = pneg %p278
        %p669 = scmp.lt.s32.totalorder %s34, 1
        %s670 = scalar_select %p669, %s34, 1
        %s671 = scalar_lea.vmem %s10, %s670
        %p672 = pneg %p307
        %p673 = pneg %p304
        %p674 = scmp.lt.s32.totalorder %s34, 1
        %s675 = scalar_select %p674, %s34, 1
        %s676 = scalar_lea.vmem %s11, %s675
        %p677 = pneg %p333
        %p678 = pneg %p330
        %p679 = scmp.lt.s32.totalorder %s34, 1
        %s680 = scalar_select %p679, %s34, 1
        %s681 = scalar_lea.vmem %s12, %s680
        %p682 = pneg %p359
        %p683 = pneg %p356
        %p684 = scmp.lt.s32.totalorder %s34, 1
        %s685 = scalar_select %p684, %s34, 1
        %s686 = smul.addr %s685, 4
        %s687 = smul.addr %s686, 4
        %s688 = scalar_lea.vmem %s13, %s687
        %p689 = pneg %p385
        %p690 = pneg %p382
        %p691 = scmp.lt.s32.totalorder %s34, 1
        %s692 = scalar_select %p691, %s34, 1
        %s693 = scalar_lea.vmem %s14, %s692
        %p694 = pneg %p411
        %p695 = pneg %p408
        %p696 = scmp.lt.s32.totalorder %s34, 1
        %s697 = scalar_select %p696, %s34, 1
        %s698 = smul.addr %s697, 16
        %s699 = smul.addr %s698, 4
        %s700 = scalar_lea.vmem %s15, %s699
        %p701 = pneg %p437
        %p702 = pneg %p434
        %p703 = scmp.lt.s32.totalorder %s34, 1
        %s704 = scalar_select %p703, %s34, 1
        %s705 = scalar_lea.vmem %s16, %s704
        %p706 = pneg %p463
        %p707 = pneg %p460
        %p708 = pneg %p489
        %p709 = pneg %p486
        %s710 = smul.u32 2, %s33
        %p711 = scmp.lt.s32.totalorder %s710, 1
        %s712 = scalar_select %p711, %s710, 1
        %s713 = smul.addr %s712, 8
        %s714 = scalar_lea.vmem %s0, %s713
        %s715 = smul.u32 2, %s33
        %s716 = smul.u32 2, %s33
        %p717 = scmp.lt.s32.totalorder %s716, 1
        %s718 = scalar_select %p717, %s716, 1
        %s719 = scalar_lea.vmem %s1, %s718
        %s720 = smul.u32 2, %s33
        %p721 = scmp.lt.s32.totalorder %s34, 1
        %s722 = scalar_select %p721, %s34, 1
        %s723 = smul.addr %s722, 4
        %s724 = smul.addr %s723, 4
        %s725 = scalar_lea.vmem %s5, %s724
        %p726 = scmp.lt.s32.totalorder %s34, 1
        %s727 = scalar_select %p726, %s34, 1
        %s728 = scalar_lea.vmem %s6, %s727
        %p729 = scmp.lt.s32.totalorder %s34, 1
        %s730 = scalar_select %p729, %s34, 1
        %s731 = smul.addr %s730, 4
        %s732 = smul.addr %s731, 4
        %s733 = scalar_lea.vmem %s7, %s732
        %p734 = scmp.lt.s32.totalorder %s34, 1
        %s735 = scalar_select %p734, %s34, 1
        %s736 = scalar_lea.vmem %s8, %s735
        %p737 = scmp.lt.s32.totalorder %s34, 1
        %s738 = scalar_select %p737, %s34, 1
        %s739 = scalar_lea.vmem %s9, %s738
        %p740 = scmp.lt.s32.totalorder %s34, 1
        %s741 = scalar_select %p740, %s34, 1
        %s742 = scalar_lea.vmem %s10, %s741
        %p743 = scmp.lt.s32.totalorder %s34, 1
        %s744 = scalar_select %p743, %s34, 1
        %s745 = scalar_lea.vmem %s11, %s744
        %p746 = scmp.lt.s32.totalorder %s34, 1
        %s747 = scalar_select %p746, %s34, 1
        %s748 = scalar_lea.vmem %s12, %s747
        %p749 = scmp.lt.s32.totalorder %s34, 1
        %s750 = scalar_select %p749, %s34, 1
        %s751 = smul.addr %s750, 4
        %s752 = smul.addr %s751, 4
        %s753 = scalar_lea.vmem %s13, %s752
        %p754 = scmp.lt.s32.totalorder %s34, 1
        %s755 = scalar_select %p754, %s34, 1
        %s756 = scalar_lea.vmem %s14, %s755
        %p757 = scmp.lt.s32.totalorder %s34, 1
        %s758 = scalar_select %p757, %s34, 1
        %s759 = smul.addr %s758, 16
        %s760 = smul.addr %s759, 4
        %s761 = scalar_lea.vmem %s15, %s760
        %p762 = scmp.lt.s32.totalorder %s34, 1
        %s763 = scalar_select %p762, %s34, 1
        %s764 = scalar_lea.vmem %s16, %s763
        %s765 = smul.u32 2, %s33
        %p767 = scmp.eq.s32.totalorder %s34, 0
        // Predicated region
        $region89: #{tpu_custom_call.1} parent=87 // pred_check
          %p768 = pneg %p767
        $region90: #{tpu_custom_call.1} parent=87 // pred_check_branch
          %770 = sbr.rel (%p768) target = $region92
        $region91: #{tpu_custom_call.1} parent=87 // pred_region
          %v771 = vld [vmem:[%s714] sm:$0xff]
          %v772 = vld [vmem:[%s714 + $0x8] sm:$0xff]
          %v773 = vld [vmem:[%s2] sm:$0xff]
          %v774 = vld [vmem:[%s2 + $0x8] sm:$0xff]
          %v775 = vld [vmem:[%s3] sm:$0x1]
          %v777 = vperm.slane %v775, 0
          %vm779 = vcmask 130048
          %v781 = vsel %vm779, %v771, 0
          %v784 = vsel %vm779, %v772, 0
          %786 = vmatpush.msra.mxu0 0.0
          %787 = vmatpush.msra.mxu0 0.0
          %788 = vmatpush.msra.mxu0 0.0
          %789 = vmatpush.msra.mxu0 0.0
          %790 = vmatpush.msra.mxu0 0.0
          %791 = vmatpush.msra.mxu0 0.0
          %792 = vmatpush.msra.mxu0 0.0
          %793 = vmatpush.msra.mxu0 0.0
          %794 = vmatpush.msra.mxu0 0.0
          %795 = vmatpush.msra.mxu0 0.0
          %796 = vmatpush.msra.mxu0 0.0
          %797 = vmatpush.msra.mxu0 0.0
          %798 = vmatpush.msra.mxu0 0.0
          %799 = vmatpush.msra.mxu0 0.0
          %800 = vmatpush.msra.mxu0 %v774
          %801 = vmatpush.msra.mxu0 %v773
          %802 = vmatmul.f32.gmra.mxu0 %v781
          %v803 = vpop.f32.mrf.mxu0
          %v804 = vadd.f32 %v777, %v803
          %805 = vmatmul.f32.gmra.mxu0 %v784
          %v806 = vpop.f32.mrf.mxu0
          %v807 = vadd.f32 %v777, %v806
          %808 = vdwg.mxu0
          %v809 = vld [vmem:[%s4] sm:$0xff]
          %v810 = vadd.f32 %v804, %v809
          %v811 = vadd.f32 %v807, %v809
          %vm812 = vcmask 261120
          %813 = vst.msk [vmem:[#allocation3] sm:$0xff] %vm812, %v810
          %814 = vst.msk [vmem:[#allocation3 + $0x8] sm:$0xff] %vm812, %v811
        $region92: #{tpu_custom_call.1} parent=87 // pred_fallthru
          _
        %v815 = vld [vmem:[#allocation3] sm:$0xff]
        %v816 = vld [vmem:[#allocation3 + $0x8] sm:$0xff]
        %v817 = vld [vmem:[%s719] sm:$0x1]
        %v818 = vld [vmem:[%s719 + $0x1] sm:$0x1]
        %v821 = vperm.slane %v817, 0
        %v822 = vperm.slane %v818, 0
        %v825 = vld [vmem:[%s739] sm:$0x1]
        %v826 = vld [vmem:[%s742] sm:$0x1]
        %vm827 = vcmask 261120
        %v828 = vsel %vm827, %v815, 0.0
        %829 = vadd.xlane.f32.xlu0 %v828
        %v830 = vpop.xlane.xlu0 %829
        %v831 = vsel %vm827, %v816, 0.0
        %832 = vadd.xlane.f32.xlu0 %v831
        %v833 = vpop.xlane.xlu0 %832
        %v834 = vrcp.pop 32.0
        %v835 = vmul.f32 32.0, %v834
        %v836 = vsub.f32 1.0, %v835
        %v837 = vmul.f32 %v834, %v836
        %v838 = vadd.f32 %v834, %v837
        %vm839 = vweird.f32 %v834
        %v840 = vsel %vm839, %v834, %v838
        %v841 = vmul.f32 %v830, %v840
        %v842 = vmul.f32 %v833, %v840
        %v843 = vsub.f32 %v815, %v841
        %v844 = vsub.f32 %v816, %v842
        %v845 = vmul.f32 %v843, %v843
        %v846 = vmul.f32 %v844, %v844
        %v847 = vsel %vm827, %v845, 0.0
        %848 = vadd.xlane.f32.xlu0 %v847
        %v849 = vpop.xlane.xlu0 %848
        %v850 = vsel %vm827, %v846, 0.0
        %851 = vadd.xlane.f32.xlu0 %v850
        %v852 = vpop.xlane.xlu0 %851
        %v853 = vrcp.pop 31.0
        %v854 = vmul.f32 31.0, %v853
        %v855 = vsub.f32 1.0, %v854
        %v856 = vmul.f32 %v853, %v855
        %v857 = vadd.f32 %v853, %v856
        %vm858 = vweird.f32 %v853
        %v859 = vsel %vm858, %v853, %v857
        %v860 = vmul.f32 %v849, %v859
        %v861 = vmul.f32 %v852, %v859
        %v862 = vrsqrt.pop %v860
        %v863 = vmul.f32 %v862, %v860
        %v864 = vmul.f32 %v863, %v862
        %v865 = vmul.f32 0.5, %v864
        %v866 = vsub.f32 1.5, %v865
        %v867 = vmul.f32 %v862, %v866
        %v868 = vmul.f32 %v860, %v867
        %vm869 = vcmp.eq.f32.partialorder %v860, inf
        %v870 = vsel %vm869, %v860, %v868
        %vm871 = vcmp.eq.f32.partialorder %v860, 0.0
        %v872 = vand.u32 %v860, 2147483648
        %v873 = vsel %vm871, %v872, %v870
        %v874 = vrsqrt.pop %v861
        %v875 = vmul.f32 %v874, %v861
        %v876 = vmul.f32 %v875, %v874
        %v877 = vmul.f32 0.5, %v876
        %v878 = vsub.f32 1.5, %v877
        %v879 = vmul.f32 %v874, %v878
        %v880 = vmul.f32 %v861, %v879
        %vm881 = vcmp.eq.f32.partialorder %v861, inf
        %v882 = vsel %vm881, %v861, %v880
        %vm883 = vcmp.eq.f32.partialorder %v861, 0.0
        %v884 = vand.u32 %v861, 2147483648
        %v885 = vsel %vm883, %v884, %v882
        %v886 = vadd.f32 %v873, 1e-06
        %v887 = vadd.f32 %v885, 1e-06
        %v888 = vrcp.pop %v886
        %v889 = vrcp.pop %v887
        %v891 = vperm.slane %v825, 0
        %v893 = vmul.f32 %v891, %v843
        %v894 = vmul.f32 %v891, %v844
        %v895 = vmul.f32 %v893, %v888
        %v896 = vmul.f32 %v894, %v889
        %v898 = vperm.slane %v826, 0
        %v900 = vadd.f32 %v895, %v898
        %v901 = vadd.f32 %v896, %v898
        %v902 = vpack.c.bf16 %v901, %v900
        %v903 = vld [vmem:[%s725] sm:$0xf]
        %v904 = vld [vmem:[%s725 + $0x4] sm:$0xf]
        %v905 = vld [vmem:[%s725 + $0x8] sm:$0xf]
        %v906 = vld [vmem:[%s725 + $0xc] sm:$0xf]
        %v907 = vld [vmem:[%s728] sm:$0x1]
        %v909 = vperm.slane %v907, 0
        %v915 = vunpack.c.l.b16 %v903
        %v916 = vunpack.c.l.b16 %v904
        %v917 = vunpack.c.l.b16 %v905
        %v918 = vunpack.c.l.b16 %v906
        %v919 = vpack.c.b16 %v916, %v915
        %v920 = vpack.c.b16 %v918, %v917
        %v924 = vsel %vm827, %v902, 0
        %926 = vmatpush.bf16.msra.mxu0 0
        %927 = vmatpush.bf16.msra.mxu0 0
        %928 = vmatpush.bf16.msra.mxu0 0
        %929 = vmatpush.bf16.msra.mxu0 0
        %930 = vmatpush.bf16.msra.mxu0 0
        %931 = vmatpush.bf16.msra.mxu0 0
        %932 = vmatpush.bf16.msra.mxu0 %v920
        %933 = vmatpush.bf16.msra.mxu0 %v919
        %934 = vmatmul.bf16.gmra.mxu0 %v924
        %v935 = vpop.f32.mrf.mxu0
        %v936 = vadd.f32 %v909, %v935
        %v937 = vpop.f32.mrf.mxu0
        %v938 = vadd.f32 %v909, %v937
        %939 = vdwg.mxu0
        %v940 = vpack.c.bf16 %v936, %v936
        %v941 = vpack.c.bf16 %v938, %v938
        %v943 = vunpack.c.l.b16 %v940
        %v944 = vpack.c.b16 %v943, %v943
        %945 = vrot.lane.b32.xlu0 %v944, 96
        %v946 = vpop.permute.xlu0 %945
        %vm947 = vcmask 64512
        %v949 = vsel %vm947, %v940, 0
        %v952 = vsel %vm947, %v946, 0
        %954 = vmatpush.bf16.xpose.msra.mxu0 0
        %955 = vmatpush.bf16.xpose.msra.mxu0 0
        %956 = vmatpush.bf16.xpose.msra.mxu0 0
        %957 = vmatpush.bf16.xpose.msra.mxu0 0
        %958 = vmatpush.bf16.xpose.msra.mxu0 0
        %959 = vmatpush.bf16.xpose.msra.mxu0 0
        %960 = vmatpush.bf16.xpose.msra.mxu0 0
        %961 = vmatpush.bf16.xpose.msra.mxu0 %v952
        %962 = vmatmul.bf16.gmra.mxu0 %v949
        %v963 = vpop.f32.mrf.mxu0
        %v964 = vadd.f32 %v821, %v963
        %v965 = vpop.f32.mrf.mxu0
        %966 = vdwg.mxu0
        %v968 = vunpack.c.l.b16 %v941
        %v969 = vpack.c.b16 %v968, %v968
        %970 = vrot.lane.b32.xlu0 %v969, 96
        %v971 = vpop.permute.xlu0 %970
        %v973 = vsel %vm947, %v941, 0
        %v976 = vsel %vm947, %v971, 0
        %978 = vmatpush.bf16.xpose.msra.mxu0 0
        %979 = vmatpush.bf16.xpose.msra.mxu0 0
        %980 = vmatpush.bf16.xpose.msra.mxu0 0
        %981 = vmatpush.bf16.xpose.msra.mxu0 0
        %982 = vmatpush.bf16.xpose.msra.mxu0 0
        %983 = vmatpush.bf16.xpose.msra.mxu0 0
        %984 = vmatpush.bf16.xpose.msra.mxu0 0
        %985 = vmatpush.bf16.xpose.msra.mxu0 %v976
        %986 = vmatmul.bf16.gmra.mxu0 %v973
        %v987 = vpop.f32.mrf.mxu0
        %v988 = vadd.f32 %v822, %v987
        %v989 = vpop.f32.mrf.mxu0
        %990 = vdwg.mxu0
        %v991 = vsel %vm947, %v964, -inf
        %992 = vmax.xlane.f32.xlu0 %v991
        %v993 = vpop.xlane.xlu0 %992
        %v994 = vsel %vm947, %v988, -inf
        %995 = vmax.xlane.f32.xlu0 %v994
        %v996 = vpop.xlane.xlu0 %995
        %v997 = vsub.f32 %v964, %v993
        %v998 = vsub.f32 %v988, %v996
        %v999 = vmul.f32 %v997, 1.442695
        %v1000 = vpow.pop %v999
        %v1001 = vmul.f32 %v998, 1.442695
        %v1002 = vpow.pop %v1001
        %v1003 = vsel %vm947, %v1000, 0.0
        %1004 = vadd.xlane.f32.xlu0 %v1003
        %v1005 = vpop.xlane.xlu0 %1004
        %v1006 = vsel %vm947, %v1002, 0.0
        %1007 = vadd.xlane.f32.xlu0 %v1006
        %v1008 = vpop.xlane.xlu0 %1007
        %v1009 = vrcp.pop %v1005
        %v1010 = vrcp.pop %v1008
        %v1011 = vmul.f32 %v1000, %v1009
        %v1012 = vmul.f32 %v1002, %v1010
        %v1013 = vpack.c.bf16 %v1011, %v1011
        %v1014 = vpack.c.bf16 %v1012, %v1012
        %1015 = vrot.lane.b32.xlu0 %v944, 64
        %v1016 = vpop.permute.xlu0 %1015
        %v1018 = vsel %vm947, %v1013, 0
        %vm1020 = vcmask 1043456
        %v1022 = vsel %vm1020, %v1016, 0
        %1024 = vmatpush.bf16.msra.mxu0 0
        %1025 = vmatpush.bf16.msra.mxu0 0
        %1026 = vmatpush.bf16.msra.mxu0 0
        %1027 = vmatpush.bf16.msra.mxu0 0
        %1028 = vmatpush.bf16.msra.mxu0 0
        %1029 = vmatpush.bf16.msra.mxu0 0
        %1030 = vmatpush.bf16.msra.mxu0 0
        %1031 = vmatpush.bf16.msra.mxu0 %v1022
        %1032 = vmatmul.bf16.gmra.mxu0 %v1018
        %v1033 = vpop.f32.mrf.mxu0
        %v1034 = vadd.f32 0.0, %v1033
        %v1035 = vpop.f32.mrf.mxu0
        %1036 = vdwg.mxu0
        %1037 = vrot.lane.b32.xlu0 %v969, 64
        %v1038 = vpop.permute.xlu0 %1037
        %v1040 = vsel %vm947, %v1014, 0
        %v1043 = vsel %vm1020, %v1038, 0
        %1045 = vmatpush.bf16.msra.mxu0 0
        %1046 = vmatpush.bf16.msra.mxu0 0
        %1047 = vmatpush.bf16.msra.mxu0 0
        %1048 = vmatpush.bf16.msra.mxu0 0
        %1049 = vmatpush.bf16.msra.mxu0 0
        %1050 = vmatpush.bf16.msra.mxu0 0
        %1051 = vmatpush.bf16.msra.mxu0 0
        %1052 = vmatpush.bf16.msra.mxu0 %v1043
        %1053 = vmatmul.bf16.gmra.mxu0 %v1040
        %v1054 = vpop.f32.mrf.mxu0
        %v1055 = vadd.f32 0.0, %v1054
        %v1056 = vpop.f32.mrf.mxu0
        %1057 = vdwg.mxu0
        %1058 = vst.msk [vmem:[#allocation2] sm:$0xff] %vm947, %v1034
        %1059 = vst.msk [vmem:[#allocation2 + $0x8] sm:$0xff] %vm947, %v1055
        %1060 = vrot.lane.b32.xlu0 %v944, 120
        %v1061 = vpop.permute.xlu0 %1060
        %1062 = vrot.lane.b32.xlu0 %v944, 88
        %v1063 = vpop.permute.xlu0 %1062
        %v1065 = vsel %vm947, %v1061, 0
        %v1068 = vsel %vm947, %v1063, 0
        %1070 = vmatpush.bf16.xpose.msra.mxu0 0
        %1071 = vmatpush.bf16.xpose.msra.mxu0 0
        %1072 = vmatpush.bf16.xpose.msra.mxu0 0
        %1073 = vmatpush.bf16.xpose.msra.mxu0 0
        %1074 = vmatpush.bf16.xpose.msra.mxu0 0
        %1075 = vmatpush.bf16.xpose.msra.mxu0 0
        %1076 = vmatpush.bf16.xpose.msra.mxu0 0
        %1077 = vmatpush.bf16.xpose.msra.mxu0 %v1068
        %1078 = vmatmul.bf16.gmra.mxu0 %v1065
        %v1079 = vpop.f32.mrf.mxu0
        %v1080 = vadd.f32 %v821, %v1079
        %v1081 = vpop.f32.mrf.mxu0
        %1082 = vdwg.mxu0
        %1083 = vrot.lane.b32.xlu0 %v969, 120
        %v1084 = vpop.permute.xlu0 %1083
        %1085 = vrot.lane.b32.xlu0 %v969, 88
        %v1086 = vpop.permute.xlu0 %1085
        %v1088 = vsel %vm947, %v1084, 0
        %v1091 = vsel %vm947, %v1086, 0
        %1093 = vmatpush.bf16.xpose.msra.mxu0 0
        %1094 = vmatpush.bf16.xpose.msra.mxu0 0
        %1095 = vmatpush.bf16.xpose.msra.mxu0 0
        %1096 = vmatpush.bf16.xpose.msra.mxu0 0
        %1097 = vmatpush.bf16.xpose.msra.mxu0 0
        %1098 = vmatpush.bf16.xpose.msra.mxu0 0
        %1099 = vmatpush.bf16.xpose.msra.mxu0 0
        %1100 = vmatpush.bf16.xpose.msra.mxu0 %v1091
        %1101 = vmatmul.bf16.gmra.mxu0 %v1088
        %v1102 = vpop.f32.mrf.mxu0
        %v1103 = vadd.f32 %v822, %v1102
        %v1104 = vpop.f32.mrf.mxu0
        %1105 = vdwg.mxu0
        %v1106 = vsel %vm947, %v1080, -inf
        %1107 = vmax.xlane.f32.xlu0 %v1106
        %v1108 = vpop.xlane.xlu0 %1107
        %v1109 = vsel %vm947, %v1103, -inf
        %1110 = vmax.xlane.f32.xlu0 %v1109
        %v1111 = vpop.xlane.xlu0 %1110
        %v1112 = vsub.f32 %v1080, %v1108
        %v1113 = vsub.f32 %v1103, %v1111
        %v1114 = vmul.f32 %v1112, 1.442695
        %v1115 = vpow.pop %v1114
        %v1116 = vmul.f32 %v1113, 1.442695
        %v1117 = vpow.pop %v1116
        %v1118 = vsel %vm947, %v1115, 0.0
        %1119 = vadd.xlane.f32.xlu0 %v1118
        %v1120 = vpop.xlane.xlu0 %1119
        %v1121 = vsel %vm947, %v1117, 0.0
        %1122 = vadd.xlane.f32.xlu0 %v1121
        %v1123 = vpop.xlane.xlu0 %1122
        %v1124 = vrcp.pop %v1120
        %v1125 = vrcp.pop %v1123
        %v1126 = vmul.f32 %v1115, %v1124
        %v1127 = vmul.f32 %v1117, %v1125
        %v1128 = vpack.c.bf16 %v1126, %v1126
        %v1129 = vpack.c.bf16 %v1127, %v1127
        %1130 = vrot.lane.b32.xlu0 %v944, 56
        %v1131 = vpop.permute.xlu0 %1130
        %v1133 = vsel %vm947, %v1128, 0
        %v1136 = vsel %vm1020, %v1131, 0
        %1138 = vmatpush.bf16.msra.mxu0 0
        %1139 = vmatpush.bf16.msra.mxu0 0
        %1140 = vmatpush.bf16.msra.mxu0 0
        %1141 = vmatpush.bf16.msra.mxu0 0
        %1142 = vmatpush.bf16.msra.mxu0 0
        %1143 = vmatpush.bf16.msra.mxu0 0
        %1144 = vmatpush.bf16.msra.mxu0 0
        %1145 = vmatpush.bf16.msra.mxu0 %v1136
        %1146 = vmatmul.bf16.gmra.mxu0 %v1133
        %v1147 = vpop.f32.mrf.mxu0
        %v1148 = vadd.f32 0.0, %v1147
        %v1149 = vpop.f32.mrf.mxu0
        %1150 = vdwg.mxu0
        %1151 = vrot.lane.b32.xlu0 %v969, 56
        %v1152 = vpop.permute.xlu0 %1151
        %v1154 = vsel %vm947, %v1129, 0
        %v1157 = vsel %vm1020, %v1152, 0
        %1159 = vmatpush.bf16.msra.mxu0 0
        %1160 = vmatpush.bf16.msra.mxu0 0
        %1161 = vmatpush.bf16.msra.mxu0 0
        %1162 = vmatpush.bf16.msra.mxu0 0
        %1163 = vmatpush.bf16.msra.mxu0 0
        %1164 = vmatpush.bf16.msra.mxu0 0
        %1165 = vmatpush.bf16.msra.mxu0 0
        %1166 = vmatpush.bf16.msra.mxu0 %v1157
        %1167 = vmatmul.bf16.gmra.mxu0 %v1154
        %v1168 = vpop.f32.mrf.mxu0
        %v1169 = vadd.f32 0.0, %v1168
        %v1170 = vpop.f32.mrf.mxu0
        %1171 = vdwg.mxu0
        %1174 = vrot.lane.b32.xlu0 %v1148, 8
        %v1175 = vpop.permute.xlu0 %1174
        %1176 = vrot.lane.b32.xlu0 %v1169, 8
        %v1177 = vpop.permute.xlu0 %1176
        %vm1180 = vcmask 130112
        %1181 = vst.msk [vmem:[#allocation2] sm:$0xff] %vm1180, %v1175
        %1182 = vst.msk [vmem:[#allocation2 + $0x8] sm:$0xff] %vm1180, %v1177
        %1183 = vrot.lane.b32.xlu0 %v944, 112
        %v1184 = vpop.permute.xlu0 %1183
        %1185 = vrot.lane.b32.xlu0 %v944, 80
        %v1186 = vpop.permute.xlu0 %1185
        %v1188 = vsel %vm947, %v1184, 0
        %v1191 = vsel %vm947, %v1186, 0
        %1193 = vmatpush.bf16.xpose.msra.mxu0 0
        %1194 = vmatpush.bf16.xpose.msra.mxu0 0
        %1195 = vmatpush.bf16.xpose.msra.mxu0 0
        %1196 = vmatpush.bf16.xpose.msra.mxu0 0
        %1197 = vmatpush.bf16.xpose.msra.mxu0 0
        %1198 = vmatpush.bf16.xpose.msra.mxu0 0
        %1199 = vmatpush.bf16.xpose.msra.mxu0 0
        %1200 = vmatpush.bf16.xpose.msra.mxu0 %v1191
        %1201 = vmatmul.bf16.gmra.mxu0 %v1188
        %v1202 = vpop.f32.mrf.mxu0
        %v1203 = vadd.f32 %v821, %v1202
        %v1204 = vpop.f32.mrf.mxu0
        %1205 = vdwg.mxu0
        %1206 = vrot.lane.b32.xlu0 %v969, 112
        %v1207 = vpop.permute.xlu0 %1206
        %1208 = vrot.lane.b32.xlu0 %v969, 80
        %v1209 = vpop.permute.xlu0 %1208
        %v1211 = vsel %vm947, %v1207, 0
        %v1214 = vsel %vm947, %v1209, 0
        %1216 = vmatpush.bf16.xpose.msra.mxu0 0
        %1217 = vmatpush.bf16.xpose.msra.mxu0 0
        %1218 = vmatpush.bf16.xpose.msra.mxu0 0
        %1219 = vmatpush.bf16.xpose.msra.mxu0 0
        %1220 = vmatpush.bf16.xpose.msra.mxu0 0
        %1221 = vmatpush.bf16.xpose.msra.mxu0 0
        %1222 = vmatpush.bf16.xpose.msra.mxu0 0
        %1223 = vmatpush.bf16.xpose.msra.mxu0 %v1214
        %1224 = vmatmul.bf16.gmra.mxu0 %v1211
        %v1225 = vpop.f32.mrf.mxu0
        %v1226 = vadd.f32 %v822, %v1225
        %v1227 = vpop.f32.mrf.mxu0
        %1228 = vdwg.mxu0
        %v1229 = vsel %vm947, %v1203, -inf
        %1230 = vmax.xlane.f32.xlu0 %v1229
        %v1231 = vpop.xlane.xlu0 %1230
        %v1232 = vsel %vm947, %v1226, -inf
        %1233 = vmax.xlane.f32.xlu0 %v1232
        %v1234 = vpop.xlane.xlu0 %1233
        %v1235 = vsub.f32 %v1203, %v1231
        %v1236 = vsub.f32 %v1226, %v1234
        %v1237 = vmul.f32 %v1235, 1.442695
        %v1238 = vpow.pop %v1237
        %v1239 = vmul.f32 %v1236, 1.442695
        %v1240 = vpow.pop %v1239
        %v1241 = vsel %vm947, %v1238, 0.0
        %1242 = vadd.xlane.f32.xlu0 %v1241
        %v1243 = vpop.xlane.xlu0 %1242
        %v1244 = vsel %vm947, %v1240, 0.0
        %1245 = vadd.xlane.f32.xlu0 %v1244
        %v1246 = vpop.xlane.xlu0 %1245
        %v1247 = vrcp.pop %v1243
        %v1248 = vrcp.pop %v1246
        %v1249 = vmul.f32 %v1238, %v1247
        %v1250 = vmul.f32 %v1240, %v1248
        %v1251 = vpack.c.bf16 %v1249, %v1249
        %v1252 = vpack.c.bf16 %v1250, %v1250
        %1253 = vrot.lane.b32.xlu0 %v944, 48
        %v1254 = vpop.permute.xlu0 %1253
        %v1256 = vsel %vm947, %v1251, 0
        %v1259 = vsel %vm1020, %v1254, 0
        %1261 = vmatpush.bf16.msra.mxu0 0
        %1262 = vmatpush.bf16.msra.mxu0 0
        %1263 = vmatpush.bf16.msra.mxu0 0
        %1264 = vmatpush.bf16.msra.mxu0 0
        %1265 = vmatpush.bf16.msra.mxu0 0
        %1266 = vmatpush.bf16.msra.mxu0 0
        %1267 = vmatpush.bf16.msra.mxu0 0
        %1268 = vmatpush.bf16.msra.mxu0 %v1259
        %1269 = vmatmul.bf16.gmra.mxu0 %v1256
        %v1270 = vpop.f32.mrf.mxu0
        %v1271 = vadd.f32 0.0, %v1270
        %v1272 = vpop.f32.mrf.mxu0
        %1273 = vdwg.mxu0
        %1274 = vrot.lane.b32.xlu0 %v969, 48
        %v1275 = vpop.permute.xlu0 %1274
        %v1277 = vsel %vm947, %v1252, 0
        %v1280 = vsel %vm1020, %v1275, 0
        %1282 = vmatpush.bf16.msra.mxu0 0
        %1283 = vmatpush.bf16.msra.mxu0 0
        %1284 = vmatpush.bf16.msra.mxu0 0
        %1285 = vmatpush.bf16.msra.mxu0 0
        %1286 = vmatpush.bf16.msra.mxu0 0
        %1287 = vmatpush.bf16.msra.mxu0 0
        %1288 = vmatpush.bf16.msra.mxu0 0
        %1289 = vmatpush.bf16.msra.mxu0 %v1280
        %1290 = vmatmul.bf16.gmra.mxu0 %v1277
        %v1291 = vpop.f32.mrf.mxu0
        %v1292 = vadd.f32 0.0, %v1291
        %v1293 = vpop.f32.mrf.mxu0
        %1294 = vdwg.mxu0
        %1297 = vrot.lane.b32.xlu0 %v1271, 16
        %v1298 = vpop.permute.xlu0 %1297
        %1299 = vrot.lane.b32.xlu0 %v1292, 16
        %v1300 = vpop.permute.xlu0 %1299
        %vm1303 = vcmask 195712
        %1304 = vst.msk [vmem:[#allocation2] sm:$0xff] %vm1303, %v1298
        %1305 = vst.msk [vmem:[#allocation2 + $0x8] sm:$0xff] %vm1303, %v1300
        %1306 = vrot.lane.b32.xlu0 %v944, 104
        %v1307 = vpop.permute.xlu0 %1306
        %1308 = vrot.lane.b32.xlu0 %v944, 72
        %v1309 = vpop.permute.xlu0 %1308
        %v1311 = vsel %vm947, %v1307, 0
        %v1314 = vsel %vm947, %v1309, 0
        %1316 = vmatpush.bf16.xpose.msra.mxu0 0
        %1317 = vmatpush.bf16.xpose.msra.mxu0 0
        %1318 = vmatpush.bf16.xpose.msra.mxu0 0
        %1319 = vmatpush.bf16.xpose.msra.mxu0 0
        %1320 = vmatpush.bf16.xpose.msra.mxu0 0
        %1321 = vmatpush.bf16.xpose.msra.mxu0 0
        %1322 = vmatpush.bf16.xpose.msra.mxu0 0
        %1323 = vmatpush.bf16.xpose.msra.mxu0 %v1314
        %1324 = vmatmul.bf16.gmra.mxu0 %v1311
        %v1325 = vpop.f32.mrf.mxu0
        %v1326 = vadd.f32 %v821, %v1325
        %v1327 = vpop.f32.mrf.mxu0
        %1328 = vdwg.mxu0
        %1329 = vrot.lane.b32.xlu0 %v969, 104
        %v1330 = vpop.permute.xlu0 %1329
        %1331 = vrot.lane.b32.xlu0 %v969, 72
        %v1332 = vpop.permute.xlu0 %1331
        %v1334 = vsel %vm947, %v1330, 0
        %v1337 = vsel %vm947, %v1332, 0
        %1339 = vmatpush.bf16.xpose.msra.mxu0 0
        %1340 = vmatpush.bf16.xpose.msra.mxu0 0
        %1341 = vmatpush.bf16.xpose.msra.mxu0 0
        %1342 = vmatpush.bf16.xpose.msra.mxu0 0
        %1343 = vmatpush.bf16.xpose.msra.mxu0 0
        %1344 = vmatpush.bf16.xpose.msra.mxu0 0
        %1345 = vmatpush.bf16.xpose.msra.mxu0 0
        %1346 = vmatpush.bf16.xpose.msra.mxu0 %v1337
        %1347 = vmatmul.bf16.gmra.mxu0 %v1334
        %v1348 = vpop.f32.mrf.mxu0
        %v1349 = vadd.f32 %v822, %v1348
        %v1350 = vpop.f32.mrf.mxu0
        %1351 = vdwg.mxu0
        %v1352 = vsel %vm947, %v1326, -inf
        %1353 = vmax.xlane.f32.xlu0 %v1352
        %v1354 = vpop.xlane.xlu0 %1353
        %v1355 = vsel %vm947, %v1349, -inf
        %1356 = vmax.xlane.f32.xlu0 %v1355
        %v1357 = vpop.xlane.xlu0 %1356
        %v1358 = vsub.f32 %v1326, %v1354
        %v1359 = vsub.f32 %v1349, %v1357
        %v1360 = vmul.f32 %v1358, 1.442695
        %v1361 = vpow.pop %v1360
        %v1362 = vmul.f32 %v1359, 1.442695
        %v1363 = vpow.pop %v1362
        %v1364 = vsel %vm947, %v1361, 0.0
        %1365 = vadd.xlane.f32.xlu0 %v1364
        %v1366 = vpop.xlane.xlu0 %1365
        %v1367 = vsel %vm947, %v1363, 0.0
        %1368 = vadd.xlane.f32.xlu0 %v1367
        %v1369 = vpop.xlane.xlu0 %1368
        %v1370 = vrcp.pop %v1366
        %v1371 = vrcp.pop %v1369
        %v1372 = vmul.f32 %v1361, %v1370
        %v1373 = vmul.f32 %v1363, %v1371
        %v1374 = vpack.c.bf16 %v1372, %v1372
        %v1375 = vpack.c.bf16 %v1373, %v1373
        %1376 = vrot.lane.b32.xlu0 %v944, 40
        %v1377 = vpop.permute.xlu0 %1376
        %v1379 = vsel %vm947, %v1374, 0
        %v1382 = vsel %vm1020, %v1377, 0
        %1384 = vmatpush.bf16.msra.mxu0 0
        %1385 = vmatpush.bf16.msra.mxu0 0
        %1386 = vmatpush.bf16.msra.mxu0 0
        %1387 = vmatpush.bf16.msra.mxu0 0
        %1388 = vmatpush.bf16.msra.mxu0 0
        %1389 = vmatpush.bf16.msra.mxu0 0
        %1390 = vmatpush.bf16.msra.mxu0 0
        %1391 = vmatpush.bf16.msra.mxu0 %v1382
        %1392 = vmatmul.bf16.gmra.mxu0 %v1379
        %v1393 = vpop.f32.mrf.mxu0
        %v1394 = vadd.f32 0.0, %v1393
        %v1395 = vpop.f32.mrf.mxu0
        %1396 = vdwg.mxu0
        %1397 = vrot.lane.b32.xlu0 %v969, 40
        %v1398 = vpop.permute.xlu0 %1397
        %v1400 = vsel %vm947, %v1375, 0
        %v1403 = vsel %vm1020, %v1398, 0
        %1405 = vmatpush.bf16.msra.mxu0 0
        %1406 = vmatpush.bf16.msra.mxu0 0
        %1407 = vmatpush.bf16.msra.mxu0 0
        %1408 = vmatpush.bf16.msra.mxu0 0
        %1409 = vmatpush.bf16.msra.mxu0 0
        %1410 = vmatpush.bf16.msra.mxu0 0
        %1411 = vmatpush.bf16.msra.mxu0 0
        %1412 = vmatpush.bf16.msra.mxu0 %v1403
        %1413 = vmatmul.bf16.gmra.mxu0 %v1400
        %v1414 = vpop.f32.mrf.mxu0
        %v1415 = vadd.f32 0.0, %v1414
        %v1416 = vpop.f32.mrf.mxu0
        %1417 = vdwg.mxu0
        %1420 = vrot.lane.b32.xlu0 %v1394, 24
        %v1421 = vpop.permute.xlu0 %1420
        %1422 = vrot.lane.b32.xlu0 %v1415, 24
        %v1423 = vpop.permute.xlu0 %1422
        %vm1426 = vcmask 261312
        %1427 = vst.msk [vmem:[#allocation2] sm:$0xff] %vm1426, %v1421
        %1428 = vst.msk [vmem:[#allocation2 + $0x8] sm:$0xff] %vm1426, %v1423
        %v1429 = vld [vmem:[#allocation2] sm:$0xff]
        %v1430 = vld [vmem:[#allocation2 + $0x8] sm:$0xff]
        %v1431 = vpack.c.bf16 %v1430, %v1429
        %v1432 = vld [vmem:[%s733] sm:$0xf]
        %v1433 = vld [vmem:[%s733 + $0x4] sm:$0xf]
        %v1434 = vld [vmem:[%s733 + $0x8] sm:$0xf]
        %v1435 = vld [vmem:[%s733 + $0xc] sm:$0xf]
        %v1436 = vld [vmem:[%s736] sm:$0x1]
        %v1438 = vperm.slane %v1436, 0
        %v1444 = vunpack.c.l.b16 %v1432
        %v1445 = vunpack.c.l.b16 %v1433
        %v1446 = vunpack.c.l.b16 %v1434
        %v1447 = vunpack.c.l.b16 %v1435
        %v1448 = vpack.c.b16 %v1445, %v1444
        %v1449 = vpack.c.b16 %v1447, %v1446
        %v1453 = vsel %vm827, %v1431, 0
        %1455 = vmatpush.bf16.msra.mxu0 0
        %1456 = vmatpush.bf16.msra.mxu0 0
        %1457 = vmatpush.bf16.msra.mxu0 0
        %1458 = vmatpush.bf16.msra.mxu0 0
        %1459 = vmatpush.bf16.msra.mxu0 0
        %1460 = vmatpush.bf16.msra.mxu0 0
        %1461 = vmatpush.bf16.msra.mxu0 %v1449
        %1462 = vmatpush.bf16.msra.mxu0 %v1448
        %1463 = vmatmul.bf16.gmra.mxu0 %v1453
        %v1464 = vpop.f32.mrf.mxu0
        %v1465 = vadd.f32 %v1438, %v1464
        %v1466 = vpop.f32.mrf.mxu0
        %v1467 = vadd.f32 %v1438, %v1466
        %1468 = vdwg.mxu0
        %v1469 = vadd.f32 %v815, %v1465
        %v1470 = vadd.f32 %v816, %v1467
        %v1471 = vld [vmem:[%s745] sm:$0x1]
        %v1472 = vld [vmem:[%s748] sm:$0x1]
        %v1473 = vsel %vm827, %v1469, 0.0
        %1474 = vadd.xlane.f32.xlu0 %v1473
        %v1475 = vpop.xlane.xlu0 %1474
        %v1476 = vsel %vm827, %v1470, 0.0
        %1477 = vadd.xlane.f32.xlu0 %v1476
        %v1478 = vpop.xlane.xlu0 %1477
        %v1479 = vmul.f32 %v1475, %v840
        %v1480 = vmul.f32 %v1478, %v840
        %v1481 = vsub.f32 %v1469, %v1479
        %v1482 = vsub.f32 %v1470, %v1480
        %v1483 = vmul.f32 %v1481, %v1481
        %v1484 = vmul.f32 %v1482, %v1482
        %v1485 = vsel %vm827, %v1483, 0.0
        %1486 = vadd.xlane.f32.xlu0 %v1485
        %v1487 = vpop.xlane.xlu0 %1486
        %v1488 = vsel %vm827, %v1484, 0.0
        %1489 = vadd.xlane.f32.xlu0 %v1488
        %v1490 = vpop.xlane.xlu0 %1489
        %v1491 = vmul.f32 %v1487, %v859
        %v1492 = vmul.f32 %v1490, %v859
        %v1493 = vrsqrt.pop %v1491
        %v1494 = vmul.f32 %v1493, %v1491
        %v1495 = vmul.f32 %v1494, %v1493
        %v1496 = vmul.f32 0.5, %v1495
        %v1497 = vsub.f32 1.5, %v1496
        %v1498 = vmul.f32 %v1493, %v1497
        %v1499 = vmul.f32 %v1491, %v1498
        %vm1500 = vcmp.eq.f32.partialorder %v1491, inf
        %v1501 = vsel %vm1500, %v1491, %v1499
        %vm1502 = vcmp.eq.f32.partialorder %v1491, 0.0
        %v1503 = vand.u32 %v1491, 2147483648
        %v1504 = vsel %vm1502, %v1503, %v1501
        %v1505 = vrsqrt.pop %v1492
        %v1506 = vmul.f32 %v1505, %v1492
        %v1507 = vmul.f32 %v1506, %v1505
        %v1508 = vmul.f32 0.5, %v1507
        %v1509 = vsub.f32 1.5, %v1508
        %v1510 = vmul.f32 %v1505, %v1509
        %v1511 = vmul.f32 %v1492, %v1510
        %vm1512 = vcmp.eq.f32.partialorder %v1492, inf
        %v1513 = vsel %vm1512, %v1492, %v1511
        %vm1514 = vcmp.eq.f32.partialorder %v1492, 0.0
        %v1515 = vand.u32 %v1492, 2147483648
        %v1516 = vsel %vm1514, %v1515, %v1513
        %v1517 = vadd.f32 %v1504, 1e-06
        %v1518 = vadd.f32 %v1516, 1e-06
        %v1519 = vrcp.pop %v1517
        %v1520 = vrcp.pop %v1518
        %v1522 = vperm.slane %v1471, 0
        %v1524 = vmul.f32 %v1522, %v1481
        %v1525 = vmul.f32 %v1522, %v1482
        %v1526 = vmul.f32 %v1524, %v1519
        %v1527 = vmul.f32 %v1525, %v1520
        %v1529 = vperm.slane %v1472, 0
        %v1531 = vadd.f32 %v1526, %v1529
        %v1532 = vadd.f32 %v1527, %v1529
        %v1533 = vpack.c.bf16 %v1532, %v1531
        %v1534 = vld [vmem:[%s753] sm:$0xf]
        %v1535 = vld [vmem:[%s753 + $0x4] sm:$0xf]
        %v1536 = vld [vmem:[%s753 + $0x8] sm:$0xf]
        %v1537 = vld [vmem:[%s753 + $0xc] sm:$0xf]
        %v1538 = vld [vmem:[%s756] sm:$0x1]
        %v1540 = vperm.slane %v1538, 0
        %v1546 = vunpack.c.l.b16 %v1534
        %v1547 = vunpack.c.l.b16 %v1535
        %v1548 = vunpack.c.l.b16 %v1536
        %v1549 = vunpack.c.l.b16 %v1537
        %v1550 = vpack.c.b16 %v1547, %v1546
        %v1551 = vpack.c.b16 %v1549, %v1548
        %v1555 = vsel %vm827, %v1533, 0
        %1557 = vmatpush.bf16.msra.mxu0 0
        %1558 = vmatpush.bf16.msra.mxu0 0
        %1559 = vmatpush.bf16.msra.mxu0 0
        %1560 = vmatpush.bf16.msra.mxu0 0
        %1561 = vmatpush.bf16.msra.mxu0 0
        %1562 = vmatpush.bf16.msra.mxu0 0
        %1563 = vmatpush.bf16.msra.mxu0 %v1551
        %1564 = vmatpush.bf16.msra.mxu0 %v1550
        %1565 = vmatmul.bf16.gmra.mxu0 %v1555
        %v1566 = vpop.f32.mrf.mxu0
        %v1567 = vadd.f32 %v1540, %v1566
        %v1568 = vpop.f32.mrf.mxu0
        %v1569 = vadd.f32 %v1540, %v1568
        %1570 = vdwg.mxu0
        %v1571 = vmul.f32 %v1567, 0.5
        %v1572 = vmul.f32 %v1569, 0.5
        %v1573 = vmul.f32 %v1567, %v1567
        %v1574 = vmul.f32 %v1569, %v1569
        %v1575 = vmul.f32 %v1567, %v1573
        %v1576 = vmul.f32 %v1569, %v1574
        %v1577 = vmul.f32 %v1575, 0.044715
        %v1578 = vmul.f32 %v1576, 0.044715
        %v1579 = vadd.f32 %v1567, %v1577
        %v1580 = vadd.f32 %v1569, %v1578
        %v1581 = vmul.f32 %v1579, 0.7978846
        %v1582 = vmul.f32 %v1580, 0.7978846
        %v1583 = vtanh.pop %v1581
        %v1584 = vtanh.pop %v1582
        %v1585 = vadd.f32 %v1583, 1.0
        %v1586 = vadd.f32 %v1584, 1.0
        %v1587 = vmul.f32 %v1571, %v1585
        %v1588 = vmul.f32 %v1572, %v1586
        %v1589 = vpack.c.bf16 %v1588, %v1587
        %v1590 = vld [vmem:[%s761] sm:$0xf]
        %v1591 = vld [vmem:[%s761 + $0x4] sm:$0xf]
        %v1592 = vld [vmem:[%s761 + $0x8] sm:$0xf]
        %v1593 = vld [vmem:[%s761 + $0xc] sm:$0xf]
        %v1594 = vld [vmem:[%s761 + $0x10] sm:$0xf]
        %v1595 = vld [vmem:[%s761 + $0x14] sm:$0xf]
        %v1596 = vld [vmem:[%s761 + $0x18] sm:$0xf]
        %v1597 = vld [vmem:[%s761 + $0x1c] sm:$0xf]
        %v1598 = vld [vmem:[%s761 + $0x20] sm:$0xf]
        %v1599 = vld [vmem:[%s761 + $0x24] sm:$0xf]
        %v1600 = vld [vmem:[%s761 + $0x28] sm:$0xf]
        %v1601 = vld [vmem:[%s761 + $0x2c] sm:$0xf]
        %v1602 = vld [vmem:[%s761 + $0x30] sm:$0xf]
        %v1603 = vld [vmem:[%s761 + $0x34] sm:$0xf]
        %v1604 = vld [vmem:[%s761 + $0x38] sm:$0xf]
        %v1605 = vld [vmem:[%s761 + $0x3c] sm:$0xf]
        %v1606 = vld [vmem:[%s764] sm:$0x1]
        %v1608 = vperm.slane %v1606, 0
        %v1626 = vunpack.c.l.b16 %v1590
        %v1627 = vunpack.c.l.b16 %v1591
        %v1628 = vunpack.c.l.b16 %v1592
        %v1629 = vunpack.c.l.b16 %v1593
        %v1630 = vunpack.c.l.b16 %v1594
        %v1631 = vunpack.c.l.b16 %v1595
        %v1632 = vunpack.c.l.b16 %v1596
        %v1633 = vunpack.c.l.b16 %v1597
        %v1634 = vunpack.c.l.b16 %v1598
        %v1635 = vunpack.c.l.b16 %v1599
        %v1636 = vunpack.c.l.b16 %v1600
        %v1637 = vunpack.c.l.b16 %v1601
        %v1638 = vunpack.c.l.b16 %v1602
        %v1639 = vunpack.c.l.b16 %v1603
        %v1640 = vunpack.c.l.b16 %v1604
        %v1641 = vunpack.c.l.b16 %v1605
        %v1642 = vpack.c.b16 %v1627, %v1626
        %v1643 = vpack.c.b16 %v1629, %v1628
        %v1644 = vpack.c.b16 %v1631, %v1630
        %v1645 = vpack.c.b16 %v1633, %v1632
        %v1646 = vpack.c.b16 %v1635, %v1634
        %v1647 = vpack.c.b16 %v1637, %v1636
        %v1648 = vpack.c.b16 %v1639, %v1638
        %v1649 = vpack.c.b16 %v1641, %v1640
        %1658 = vmatpush.bf16.msra.mxu0 %v1649
        %1659 = vmatpush.bf16.msra.mxu0 %v1648
        %1660 = vmatpush.bf16.msra.mxu0 %v1647
        %1661 = vmatpush.bf16.msra.mxu0 %v1646
        %1662 = vmatpush.bf16.msra.mxu0 %v1645
        %1663 = vmatpush.bf16.msra.mxu0 %v1644
        %1664 = vmatpush.bf16.msra.mxu0 %v1643
        %1665 = vmatpush.bf16.msra.mxu0 %v1642
        %1666 = vmatmul.bf16.gmra.mxu0 %v1589
        %v1667 = vpop.f32.mrf.mxu0
        %v1668 = vadd.f32 %v1608, %v1667
        %v1669 = vpop.f32.mrf.mxu0
        %v1670 = vadd.f32 %v1608, %v1669
        %1671 = vdwg.mxu0
        %v1672 = vadd.f32 %v1469, %v1668
        %v1673 = vadd.f32 %v1470, %v1670
        %1674 = vst.msk [vmem:[#allocation3] sm:$0xff] %vm827, %v1672
        %1675 = vst.msk [vmem:[#allocation3 + $0x8] sm:$0xff] %vm827, %v1673
        // Predicated region
        $region93: #{tpu_custom_call.1} parent=87 // pred_check
          %p1676 = pneg %p486
        $region94: #{tpu_custom_call.1} parent=87 // pred_check_branch
          %1678 = sbr.rel (%p1676) target = $region96
        $region95: #{tpu_custom_call.1} parent=87 // pred_region
          %s1679 = smul.u32 2, %s33
          %1681 = vsyncadd [#allocation4], 0
          %s1682 = smul.addr %s1679, 8
          %s1683 = scalar_lea.hbm %s17, %s1682
          %s1684 = sshll.u32 [#allocation3], 4
          %s1685 = int_to_ptr.vmem [resolvable:$true] %s1684
          %s1686 = sshll.u32 %s1683, 4
          %s1687 = int_to_ptr.hbm [resolvable:$true] %s1686
          %1692 = dma.vmem_to_hbm [thread:$0]  %s1685, 256, %s1687, [#allocation4], 128, 128, 8
        $region96: #{tpu_custom_call.1} parent=87 // pred_fallthru
          _
        // Predicated region
        $region97: #{tpu_custom_call.1} parent=87 // pred_check
          %p1693 = pneg %p486
        $region98: #{tpu_custom_call.1} parent=87 // pred_check_branch
          %1695 = sbr.rel (%p1693) target = $region100
        $region99: #{tpu_custom_call.1} parent=87 // pred_region
          %1697 = dma.done [#allocation4], 256
        $region100: #{tpu_custom_call.1} parent=87 // pred_fallthru
          _
      $region88: #{tpu_custom_call.1} parent=5 // pred_fallthru
        _
      %p1698 = scmp.le.s32.totalorder 2, %s24
      // Predicated region
      $region101: #{tpu_custom_call.1} parent=5 // pred_check
        %p1699 = pneg %p1698
      $region102: #{tpu_custom_call.1} parent=5 // pred_check_branch
        %1701 = sbr.rel (%p1699) target = $region104
      $region103: #{tpu_custom_call.1} parent=5 // pred_region
        %s1702 = ssub.s32 %s24, 2
      $region104: #{tpu_custom_call.1} parent=5 // pred_fallthru
        _
    $region6: #{tpu_custom_call.1} parent=1 // loop_footer
      %s28 = sadd.s32 1, %s24
    $region7: #{tpu_custom_call.1} parent=1 // loop_footer_branch
      %23 = sbr.rel target = $region3
    $region8: #{tpu_custom_call.1} parent=1 // loop_exit
      _
    %1703 = vsyncpa [#allocation4], 1
    %s1704 = scalar_lea.sflag [#allocation4], 1
    %1705 = vsyncpa %s1704, 1

</llo_original>
